<compile_context>
chip_gen: v7x
topology: tpu7x:2x2x1
jax: 0.10.0
libtpu: 0.0.40
codegen_flags: <defaults>
</compile_context>

<pallas_src>
import jax
import jax.numpy as jnp
from jax import lax
from jax.experimental import pallas as pl
from jax.experimental.pallas import tpu as pltpu


def conv_lstm_classifier_kernel(
    xcols_ref,   # (T*B, K*C_in) bf16   im2col'd input, time-major rows (t*B + b)
    wconv_ref,   # (K*C_in, C_out) bf16 im2col conv weight
    sc_ref,      # (1, C_out) f32       fused BN scale = gamma / sqrt(var+eps)
    sh_ref,      # (1, C_out) f32       fused BN shift (conv bias folded in)
    wih_f_ref,   # (C_out, 4H) bf16     fwd LSTM input proj, order [i,f,o,g], i/f/o *0.5
    bih_f_ref,   # (1, 4H) f32          fwd biases (b_ih+b_hh), reordered, i/f/o *0.5
    wih_b_ref,   # (C_out, 4H) bf16     bwd LSTM input proj (same treatment)
    bih_b_ref,   # (1, 4H) f32
    whh_ref,     # (H, 4H) bf16         fwd LSTM W_hh^T, order [i,f,o,g], i/f/o *0.5
    w1f_ref,     # (H, 64) f32          fc1 weight^T, columns fed by forward h
    w1b_ref,     # (H, 64) f32          fc1 weight^T, columns fed by backward h
    b1_ref,      # (1, 64) f32
    w2_ref,      # (64, num_classes) f32
    b2_ref,      # (1, num_classes) f32
    out_ref,     # (B, num_classes) f32 logits
    gx_ref,      # scratch VMEM (T*B, 4H) f32: forward input-side gates
):
    TB, H4 = gx_ref.shape
    H = whh_ref.shape[0]
    B = out_ref.shape[0]
    T = TB // B
    H3 = 3 * H

    # ---- Conv1d (im2col) + BN(eval, fused affine) + ReLU: one MXU matmul ----
    conv = jnp.dot(xcols_ref[...], wconv_ref[...],
                   preferred_element_type=jnp.float32)            # (T*B, C_out)
    y = jnp.maximum(conv * sc_ref[...] + sh_ref[...], 0.0)        # f32
    y_bf = y.astype(jnp.bfloat16)

    # ---- forward-direction input projection for ALL timesteps (one matmul) ----
    # Flat (T*B, 4H) store: no reshape, no relayout before the recurrence starts.
    gx_ref[...] = jnp.dot(y_bf, wih_f_ref[...],
                          preferred_element_type=jnp.float32) + bih_f_ref[...]

    # ---- backward direction needs only t = T-1 (zero initial state) ----
    y_last = y[(T - 1) * B:T * B, :].astype(jnp.bfloat16)         # (B, C_out)
    gb = jnp.dot(y_last, wih_b_ref[...],
                 preferred_element_type=jnp.float32) + bih_b_ref[...]   # (B, 4H)

    # ---- forward recurrence: per step only h @ W_hh + one tanh over 4H lanes ----
    # (Static unroll for LLO visibility; T is small.  If a bundle dump ever shows
    #  vreg spills here, switch to lax.fori_loop(0, T, body, (h, c), unroll=True).)
    w_hh = whh_ref[...]
    h = jnp.zeros((B, H), jnp.float32)
    c = jnp.zeros((B, H), jnp.float32)
    for t in range(T):
        gates = gx_ref[pl.ds(t * B, B), :] + jnp.dot(
            h.astype(jnp.bfloat16), w_hh, preferred_element_type=jnp.float32)
        tg = jnp.tanh(gates)                       # single activation over [i,f,o,g]
        sig = 0.5 * tg[:, :H3] + 0.5               # sigmoid(z) = 0.5*tanh(z/2)+0.5
        g = tg[:, H3:]
        c = sig[:, H:2 * H] * c + sig[:, :H] * g
        h = sig[:, 2 * H:] * jnp.tanh(c)

    # ---- backward direction: one exact step from zero state on x_{T-1} ----
    tb = jnp.tanh(gb)
    sig_b = 0.5 * tb[:, :H3] + 0.5
    c_b = sig_b[:, :H] * tb[:, H3:]                # f * c0 = 0 with zero init state
    h_b = sig_b[:, 2 * H:] * jnp.tanh(c_b)

    # ---- FC head: Linear -> ReLU -> Dropout(identity, eval) -> Linear ----
    # fc1 weight pre-split so no [h, h_b] lane-concat is needed.
    z1 = jnp.maximum(
        jnp.dot(h, w1f_ref[...], preferred_element_type=jnp.float32)
        + jnp.dot(h_b, w1b_ref[...], preferred_element_type=jnp.float32)
        + b1_ref[...], 0.0)
    out_ref[...] = (jnp.dot(z1, w2_ref[...], preferred_element_type=jnp.float32)
                    + b2_ref[...])


def conv_lstm_classifier(x, p):
    """x: (B, T, C_in) float32. Returns (B, num_classes) float32 logits."""
    B, T, C_in = x.shape
    C_out, _, K = p['conv_w'].shape
    H = p['w_hh_f'].shape[1]
    num_classes = p['fc2_w'].shape[0]
    eps = 1e-5

    # ---- im2col for Conv1d(kernel=K, padding=K//2), time-major rows ----
    pad = K // 2
    x_pad = jnp.pad(x, ((0, 0), (pad, pad), (0, 0)))              # (B, T+2*pad, C_in)
    x_cols = jnp.concatenate([x_pad[:, k:k + T, :] for k in range(K)],
                             axis=-1)                             # (B, T, K*C_in)
    x_cols = jnp.transpose(x_cols, (1, 0, 2)).reshape(T * B, K * C_in)
    x_cols = x_cols.astype(jnp.bfloat16)

    # conv weight (C_out, C_in, K) -> (K*C_in, C_out) matching the im2col layout
    w_conv = jnp.transpose(p['conv_w'], (2, 1, 0)).reshape(K * C_in, C_out)
    w_conv = w_conv.astype(jnp.bfloat16)

    # fused BN (eval) scale / shift, conv bias folded in
    bn_scale = p['bn_gamma'] / jnp.sqrt(p['bn_var'] + eps)
    bn_shift = (p['conv_b'] - p['bn_mean']) * bn_scale + p['bn_beta']
    bn_scale = bn_scale.reshape(1, C_out)
    bn_shift = bn_shift.reshape(1, C_out)

    def reorder_scale(m):
        # PyTorch gate row order [i, f, g, o] -> kernel order [i, f, o, g];
        # scale i/f/o rows by 0.5 so sigmoid(z) = 0.5*tanh(scaled_gate)+0.5.
        i, f, g, o = jnp.split(m, 4, axis=0)
        return jnp.concatenate([0.5 * i, 0.5 * f, 0.5 * o, g], axis=0)

    w_ih_f = reorder_scale(p['w_ih_f']).T.astype(jnp.bfloat16)    # (C_out, 4H)
    b_f = reorder_scale(p['b_ih_f'] + p['b_hh_f']).reshape(1, 4 * H)
    w_ih_b = reorder_scale(p['w_ih_b']).T.astype(jnp.bfloat16)    # (C_out, 4H)
    b_b = reorder_scale(p['b_ih_b'] + p['b_hh_b']).reshape(1, 4 * H)
    w_hh_f = reorder_scale(p['w_hh_f']).T.astype(jnp.bfloat16)    # (H, 4H)
    # p['w_hh_b'] is unused: backward direction only needs its first (t=T-1)
    # step from zero state because the head consumes output[:, -1].

    w1_f = p['fc1_w'][:, :H].T                                    # (H, 64)
    w1_b = p['fc1_w'][:, H:].T                                    # (H, 64)
    b1 = p['fc1_b'].reshape(1, -1)
    w2 = p['fc2_w'].T                                             # (64, num_classes)
    b2 = p['fc2_b'].reshape(1, -1)

    vmem = pl.BlockSpec(memory_space=pltpu.MemorySpace.VMEM)
    return pl.pallas_call(
        conv_lstm_classifier_kernel,
        out_shape=jax.ShapeDtypeStruct((B, num_classes), jnp.float32),
        in_specs=[vmem] * 14,
        out_specs=vmem,
        scratch_shapes=[pltpu.VMEM((T * B, 4 * H), jnp.float32)],
    )(x_cols, w_conv, bn_scale, bn_shift, w_ih_f, b_f, w_ih_b, b_b,
      w_hh_f, w1_f, w1_b, b1, w2, b2)


def reference_forward(x, p):
    """Pure-JAX f32 reference mirroring the PyTorch module in eval mode."""
    eps = 1e-5
    B, T, _ = x.shape
    H = p['w_hh_f'].shape[1]

    xc = jnp.transpose(x, (0, 2, 1))                              # (B, C_in, T)
    conv = lax.conv_general_dilated(
        xc, p['conv_w'], window_strides=(1,), padding=((2, 2),),
        dimension_numbers=('NCH', 'OIH', 'NCH'))
    conv = conv + p['conv_b'][None, :, None]
    bn = ((conv - p['bn_mean'][None, :, None])
          / jnp.sqrt(p['bn_var'] + eps)[None, :, None]
          * p['bn_gamma'][None, :, None] + p['bn_beta'][None, :, None])
    y = jnp.transpose(jnp.maximum(bn, 0.0), (0, 2, 1))            # (B, T, C_out)

    def lstm_dir(seq, w_ih, w_hh, b_ih, b_hh):
        def step(carry, xt):
            h, c = carry
            g = xt @ w_ih.T + h @ w_hh.T + b_ih + b_hh
            i, f, gg, o = jnp.split(g, 4, axis=-1)
            i = jax.nn.sigmoid(i)
            f = jax.nn.sigmoid(f)
            gg = jnp.tanh(gg)
            o = jax.nn.sigmoid(o)
            c = f * c + i * gg
            h = o * jnp.tanh(c)
            return (h, c), h
        carry0 = (jnp.zeros((B, H), jnp.float32), jnp.zeros((B, H), jnp.float32))
        _, hs = lax.scan(step, carry0, jnp.transpose(seq, (1, 0, 2)))
        return jnp.transpose(hs, (1, 0, 2))                       # (B, T, H)

    h_f = lstm_dir(y, p['w_ih_f'], p['w_hh_f'], p['b_ih_f'], p['b_hh_f'])
    h_b = lstm_dir(y[:, ::-1, :], p['w_ih_b'], p['w_hh_b'],
                   p['b_ih_b'], p['b_hh_b'])[:, ::-1, :]
    h_last = jnp.concatenate([h_f[:, -1], h_b[:, -1]], axis=-1)

    z1 = jnp.maximum(h_last @ p['fc1_w'].T + p['fc1_b'], 0.0)
    return z1 @ p['fc2_w'].T + p['fc2_b']                         # dropout = identity


if __name__ == "__main__":
    # small shapes consistent with the module defaults
    B, T = 2, 16
    C_in, C_out = 7, 32        # input_dim=7, conv_channels=32
    H = 64                     # lstm_hidden=64 (module default)
    num_classes = 2

    key = jax.random.PRNGKey(0)
    keys = jax.random.split(key, 20)

    def nrm(k, shape, scale=0.1):
        return scale * jax.random.normal(k, shape, dtype=jnp.float32)

    params = {
        'conv_w': nrm(keys[0], (C_out, C_in, 5)),
        'conv_b': nrm(keys[1], (C_out,)),
        'bn_gamma': 1.0 + nrm(keys[2], (C_out,)),
        'bn_beta': nrm(keys[3], (C_out,)),
        'bn_mean': nrm(keys[4], (C_out,)),
        'bn_var': jax.random.uniform(keys[5], (C_out,), jnp.float32, 0.5, 1.5),
        'w_ih_f': nrm(keys[6], (4 * H, C_out)),
        'w_hh_f': nrm(keys[7], (4 * H, H)),
        'b_ih_f': nrm(keys[8], (4 * H,)),
        'b_hh_f': nrm(keys[9], (4 * H,)),
        'w_ih_b': nrm(keys[10], (4 * H, C_out)),
        'w_hh_b': nrm(keys[11], (4 * H, H)),
        'b_ih_b': nrm(keys[12], (4 * H,)),
        'b_hh_b': nrm(keys[13], (4 * H,)),
        'fc1_w': nrm(keys[14], (64, 2 * H)),
        'fc1_b': nrm(keys[15], (64,)),
        'fc2_w': nrm(keys[16], (num_classes, 64)),
        'fc2_b': nrm(keys[17], (num_classes,)),
    }
    x = jax.random.normal(keys[18], (B, T, C_in), dtype=jnp.float32)

    out = jax.block_until_ready(conv_lstm_classifier(x, params))
    ref = jax.block_until_ready(reference_forward(x, params))

    assert out.shape == (B, num_classes)
    # Tolerance set by the bf16 MXU feed of the conv / projection / recurrent
    # matmuls (accumulation stays f32; no approximate reciprocal anywhere).
    max_err = float(jnp.max(jnp.abs(out - ref)))
    assert max_err < 2e-2, f"kernel/reference mismatch, max abs err = {max_err}"
    print("KERNEL_OK")
</pallas_src>

<mosaic_0001>
module attributes {stable_mosaic.version = 11 : i64} {
  func.func @conv_lstm_classifier_kernel(%arg0: memref<32x35xbf16, #tpu.memory_space<vmem>>, %arg1: memref<35x32xbf16, #tpu.memory_space<vmem>>, %arg2: memref<1x32xf32, #tpu.memory_space<vmem>>, %arg3: memref<1x32xf32, #tpu.memory_space<vmem>>, %arg4: memref<32x256xbf16, #tpu.memory_space<vmem>>, %arg5: memref<1x256xf32, #tpu.memory_space<vmem>>, %arg6: memref<32x256xbf16, #tpu.memory_space<vmem>>, %arg7: memref<1x256xf32, #tpu.memory_space<vmem>>, %arg8: memref<64x256xbf16, #tpu.memory_space<vmem>>, %arg9: memref<64x64xf32, #tpu.memory_space<vmem>>, %arg10: memref<64x64xf32, #tpu.memory_space<vmem>>, %arg11: memref<1x64xf32, #tpu.memory_space<vmem>>, %arg12: memref<64x2xf32, #tpu.memory_space<vmem>>, %arg13: memref<1x2xf32, #tpu.memory_space<vmem>>, %arg14: memref<2x2xf32, #tpu.memory_space<vmem>>, %arg15: memref<32x256xf32, #tpu.memory_space<vmem>>) attributes {dimension_semantics = [], scalar_prefetch = 0 : i64, scratch_operands = 1 : i64, tpu.core_type = #tpu.core_type<tc>} {
    %c0 = arith.constant 0 : index
    %c0_0 = arith.constant 0 : index
    %0 = vector.load %arg0[%c0, %c0_0] : memref<32x35xbf16, #tpu.memory_space<vmem>>, vector<32x35xbf16>
    %c0_1 = arith.constant 0 : index
    %c0_2 = arith.constant 0 : index
    %1 = vector.load %arg1[%c0_1, %c0_2] : memref<35x32xbf16, #tpu.memory_space<vmem>>, vector<35x32xbf16>
    %cst = arith.constant dense<0.000000e+00> : vector<32x32xf32>
    %2 = tpu.matmul %0, %1, %cst {dimension_numbers = #tpu.dot_dimension_numbers<[1], [0], [0], [1], [0, 0, 1, 1], [], []>} : vector<32x35xbf16>, vector<35x32xbf16>, vector<32x32xf32> -> vector<32x32xf32>
    %c0_3 = arith.constant 0 : index
    %c0_4 = arith.constant 0 : index
    %3 = vector.load %arg2[%c0_3, %c0_4] : memref<1x32xf32, #tpu.memory_space<vmem>>, vector<1x32xf32>
    %4 = vector.broadcast %3 : vector<1x32xf32> to vector<32x32xf32>
    %5 = arith.mulf %2, %4 : vector<32x32xf32>
    %c0_5 = arith.constant 0 : index
    %c0_6 = arith.constant 0 : index
    %6 = vector.load %arg3[%c0_5, %c0_6] : memref<1x32xf32, #tpu.memory_space<vmem>>, vector<1x32xf32>
    %7 = vector.broadcast %6 : vector<1x32xf32> to vector<32x32xf32>
    %8 = arith.addf %5, %7 : vector<32x32xf32>
    %cst_7 = arith.constant 0.000000e+00 : f32
    %9 = vector.broadcast %cst_7 : f32 to vector<32x32xf32>
    %10 = arith.maximumf %8, %9 : vector<32x32xf32>
    %11 = arith.truncf %10 : vector<32x32xf32> to vector<32x32xbf16>
    %c0_8 = arith.constant 0 : index
    %c0_9 = arith.constant 0 : index
    %12 = vector.load %arg4[%c0_8, %c0_9] : memref<32x256xbf16, #tpu.memory_space<vmem>>, vector<32x256xbf16>
    %cst_10 = arith.constant dense<0.000000e+00> : vector<32x256xf32>
    %13 = tpu.matmul %11, %12, %cst_10 {dimension_numbers = #tpu.dot_dimension_numbers<[1], [0], [0], [1], [0, 0, 1, 1], [], []>} : vector<32x32xbf16>, vector<32x256xbf16>, vector<32x256xf32> -> vector<32x256xf32>
    %c0_11 = arith.constant 0 : index
    %c0_12 = arith.constant 0 : index
    %14 = vector.load %arg5[%c0_11, %c0_12] : memref<1x256xf32, #tpu.memory_space<vmem>>, vector<1x256xf32>
    %15 = vector.broadcast %14 : vector<1x256xf32> to vector<32x256xf32>
    %16 = arith.addf %13, %15 : vector<32x256xf32>
    %c0_13 = arith.constant 0 : index
    %c0_14 = arith.constant 0 : index
    %17 = vector.load %arg15[%c0_13, %c0_14] : memref<32x256xf32, #tpu.memory_space<vmem>>, vector<32x256xf32>
    tpu.vector_store %arg15[%c0_13, %c0_14], %16 {strides = array<i32>} : memref<32x256xf32, #tpu.memory_space<vmem>>, vector<32x256xf32>,
    %18 = vector.extract_strided_slice %10 {offsets = [30, 0], sizes = [2, 32], strides = [1, 1]} : vector<32x32xf32> to vector<2x32xf32>
    %19 = arith.truncf %18 : vector<2x32xf32> to vector<2x32xbf16>
    %c0_15 = arith.constant 0 : index
    %c0_16 = arith.constant 0 : index
    %20 = vector.load %arg6[%c0_15, %c0_16] : memref<32x256xbf16, #tpu.memory_space<vmem>>, vector<32x256xbf16>
    %cst_17 = arith.constant dense<0.000000e+00> : vector<2x256xf32>
    %21 = tpu.matmul %19, %20, %cst_17 {dimension_numbers = #tpu.dot_dimension_numbers<[1], [0], [0], [1], [0, 0, 1, 1], [], []>} : vector<2x32xbf16>, vector<32x256xbf16>, vector<2x256xf32> -> vector<2x256xf32>
    %c0_18 = arith.constant 0 : index
    %c0_19 = arith.constant 0 : index
    %22 = vector.load %arg7[%c0_18, %c0_19] : memref<1x256xf32, #tpu.memory_space<vmem>>, vector<1x256xf32>
    %23 = vector.broadcast %22 : vector<1x256xf32> to vector<2x256xf32>
    %24 = arith.addf %21, %23 : vector<2x256xf32>
    %c0_20 = arith.constant 0 : index
    %c0_21 = arith.constant 0 : index
    %25 = vector.load %arg8[%c0_20, %c0_21] : memref<64x256xbf16, #tpu.memory_space<vmem>>, vector<64x256xbf16>
    %cst_22 = arith.constant 0.000000e+00 : f32
    %26 = vector.broadcast %cst_22 : f32 to vector<2x64xf32>
    %cst_23 = arith.constant 0.000000e+00 : f32
    %27 = vector.broadcast %cst_23 : f32 to vector<2x64xf32>
    %c0_24 = arith.constant 0 : index
    %c0_25 = arith.constant 0 : index
    %28 = vector.load %arg15[%c0_24, %c0_25] : memref<32x256xf32, #tpu.memory_space<vmem>>, vector<2x256xf32>
    %29 = arith.truncf %26 : vector<2x64xf32> to vector<2x64xbf16>
    %cst_26 = arith.constant dense<0.000000e+00> : vector<2x256xf32>
    %30 = tpu.matmul %29, %25, %cst_26 {dimension_numbers = #tpu.dot_dimension_numbers<[1], [0], [0], [1], [0, 0, 1, 1], [], []>} : vector<2x64xbf16>, vector<64x256xbf16>, vector<2x256xf32> -> vector<2x256xf32>
    %31 = arith.addf %28, %30 : vector<2x256xf32>
    %32 = math.tanh %31 : vector<2x256xf32>
    %33 = vector.extract_strided_slice %32 {offsets = [0, 0], sizes = [2, 192], strides = [1, 1]} : vector<2x256xf32> to vector<2x192xf32>
    %cst_27 = arith.constant 5.000000e-01 : f32
    %34 = vector.broadcast %cst_27 : f32 to vector<2x192xf32>
    %35 = arith.mulf %34, %33 : vector<2x192xf32>
    %cst_28 = arith.constant 5.000000e-01 : f32
    %36 = vector.broadcast %cst_28 : f32 to vector<2x192xf32>
    %37 = arith.addf %35, %36 : vector<2x192xf32>
    %38 = vector.extract_strided_slice %32 {offsets = [0, 192], sizes = [2, 64], strides = [1, 1]} : vector<2x256xf32> to vector<2x64xf32>
    %39 = vector.extract_strided_slice %37 {offsets = [0, 64], sizes = [2, 64], strides = [1, 1]} : vector<2x192xf32> to vector<2x64xf32>
    %40 = arith.mulf %39, %27 : vector<2x64xf32>
    %41 = vector.extract_strided_slice %37 {offsets = [0, 0], sizes = [2, 64], strides = [1, 1]} : vector<2x192xf32> to vector<2x64xf32>
    %42 = arith.mulf %41, %38 : vector<2x64xf32>
    %43 = arith.addf %40, %42 : vector<2x64xf32>
    %44 = vector.extract_strided_slice %37 {offsets = [0, 128], sizes = [2, 64], strides = [1, 1]} : vector<2x192xf32> to vector<2x64xf32>
    %45 = math.tanh %43 : vector<2x64xf32>
    %46 = arith.mulf %44, %45 : vector<2x64xf32>
    %c2 = arith.constant 2 : index
    %c0_29 = arith.constant 0 : index
    %47 = vector.load %arg15[%c2, %c0_29] : memref<32x256xf32, #tpu.memory_space<vmem>>, vector<2x256xf32>
    %48 = arith.truncf %46 : vector<2x64xf32> to vector<2x64xbf16>
    %cst_30 = arith.constant dense<0.000000e+00> : vector<2x256xf32>
    %49 = tpu.matmul %48, %25, %cst_30 {dimension_numbers = #tpu.dot_dimension_numbers<[1], [0], [0], [1], [0, 0, 1, 1], [], []>} : vector<2x64xbf16>, vector<64x256xbf16>, vector<2x256xf32> -> vector<2x256xf32>
    %50 = arith.addf %47, %49 : vector<2x256xf32>
    %51 = math.tanh %50 : vector<2x256xf32>
    %52 = vector.extract_strided_slice %51 {offsets = [0, 0], sizes = [2, 192], strides = [1, 1]} : vector<2x256xf32> to vector<2x192xf32>
    %cst_31 = arith.constant 5.000000e-01 : f32
    %53 = vector.broadcast %cst_31 : f32 to vector<2x192xf32>
    %54 = arith.mulf %53, %52 : vector<2x192xf32>
    %cst_32 = arith.constant 5.000000e-01 : f32
    %55 = vector.broadcast %cst_32 : f32 to vector<2x192xf32>
    %56 = arith.addf %54, %55 : vector<2x192xf32>
    %57 = vector.extract_strided_slice %51 {offsets = [0, 192], sizes = [2, 64], strides = [1, 1]} : vector<2x256xf32> to vector<2x64xf32>
    %58 = vector.extract_strided_slice %56 {offsets = [0, 64], sizes = [2, 64], strides = [1, 1]} : vector<2x192xf32> to vector<2x64xf32>
    %59 = arith.mulf %58, %43 : vector<2x64xf32>
    %60 = vector.extract_strided_slice %56 {offsets = [0, 0], sizes = [2, 64], strides = [1, 1]} : vector<2x192xf32> to vector<2x64xf32>
    %61 = arith.mulf %60, %57 : vector<2x64xf32>
    %62 = arith.addf %59, %61 : vector<2x64xf32>
    %63 = vector.extract_strided_slice %56 {offsets = [0, 128], sizes = [2, 64], strides = [1, 1]} : vector<2x192xf32> to vector<2x64xf32>
    %64 = math.tanh %62 : vector<2x64xf32>
    %65 = arith.mulf %63, %64 : vector<2x64xf32>
    %c4 = arith.constant 4 : index
    %c0_33 = arith.constant 0 : index
    %66 = vector.load %arg15[%c4, %c0_33] : memref<32x256xf32, #tpu.memory_space<vmem>>, vector<2x256xf32>
    %67 = arith.truncf %65 : vector<2x64xf32> to vector<2x64xbf16>
    %cst_34 = arith.constant dense<0.000000e+00> : vector<2x256xf32>
    %68 = tpu.matmul %67, %25, %cst_34 {dimension_numbers = #tpu.dot_dimension_numbers<[1], [0], [0], [1], [0, 0, 1, 1], [], []>} : vector<2x64xbf16>, vector<64x256xbf16>, vector<2x256xf32> -> vector<2x256xf32>
    %69 = arith.addf %66, %68 : vector<2x256xf32>
    %70 = math.tanh %69 : vector<2x256xf32>
    %71 = vector.extract_strided_slice %70 {offsets = [0, 0], sizes = [2, 192], strides = [1, 1]} : vector<2x256xf32> to vector<2x192xf32>
    %cst_35 = arith.constant 5.000000e-01 : f32
    %72 = vector.broadcast %cst_35 : f32 to vector<2x192xf32>
    %73 = arith.mulf %72, %71 : vector<2x192xf32>
    %cst_36 = arith.constant 5.000000e-01 : f32
    %74 = vector.broadcast %cst_36 : f32 to vector<2x192xf32>
    %75 = arith.addf %73, %74 : vector<2x192xf32>
    %76 = vector.extract_strided_slice %70 {offsets = [0, 192], sizes = [2, 64], strides = [1, 1]} : vector<2x256xf32> to vector<2x64xf32>
    %77 = vector.extract_strided_slice %75 {offsets = [0, 64], sizes = [2, 64], strides = [1, 1]} : vector<2x192xf32> to vector<2x64xf32>
    %78 = arith.mulf %77, %62 : vector<2x64xf32>
    %79 = vector.extract_strided_slice %75 {offsets = [0, 0], sizes = [2, 64], strides = [1, 1]} : vector<2x192xf32> to vector<2x64xf32>
    %80 = arith.mulf %79, %76 : vector<2x64xf32>
    %81 = arith.addf %78, %80 : vector<2x64xf32>
    %82 = vector.extract_strided_slice %75 {offsets = [0, 128], sizes = [2, 64], strides = [1, 1]} : vector<2x192xf32> to vector<2x64xf32>
    %83 = math.tanh %81 : vector<2x64xf32>
    %84 = arith.mulf %82, %83 : vector<2x64xf32>
    %c6 = arith.constant 6 : index
    %c0_37 = arith.constant 0 : index
    %85 = vector.load %arg15[%c6, %c0_37] : memref<32x256xf32, #tpu.memory_space<vmem>>, vector<2x256xf32>
    %86 = arith.truncf %84 : vector<2x64xf32> to vector<2x64xbf16>
    %cst_38 = arith.constant dense<0.000000e+00> : vector<2x256xf32>
    %87 = tpu.matmul %86, %25, %cst_38 {dimension_numbers = #tpu.dot_dimension_numbers<[1], [0], [0], [1], [0, 0, 1, 1], [], []>} : vector<2x64xbf16>, vector<64x256xbf16>, vector<2x256xf32> -> vector<2x256xf32>
    %88 = arith.addf %85, %87 : vector<2x256xf32>
    %89 = math.tanh %88 : vector<2x256xf32>
    %90 = vector.extract_strided_slice %89 {offsets = [0, 0], sizes = [2, 192], strides = [1, 1]} : vector<2x256xf32> to vector<2x192xf32>
    %cst_39 = arith.constant 5.000000e-01 : f32
    %91 = vector.broadcast %cst_39 : f32 to vector<2x192xf32>
    %92 = arith.mulf %91, %90 : vector<2x192xf32>
    %cst_40 = arith.constant 5.000000e-01 : f32
    %93 = vector.broadcast %cst_40 : f32 to vector<2x192xf32>
    %94 = arith.addf %92, %93 : vector<2x192xf32>
    %95 = vector.extract_strided_slice %89 {offsets = [0, 192], sizes = [2, 64], strides = [1, 1]} : vector<2x256xf32> to vector<2x64xf32>
    %96 = vector.extract_strided_slice %94 {offsets = [0, 64], sizes = [2, 64], strides = [1, 1]} : vector<2x192xf32> to vector<2x64xf32>
    %97 = arith.mulf %96, %81 : vector<2x64xf32>
    %98 = vector.extract_strided_slice %94 {offsets = [0, 0], sizes = [2, 64], strides = [1, 1]} : vector<2x192xf32> to vector<2x64xf32>
    %99 = arith.mulf %98, %95 : vector<2x64xf32>
    %100 = arith.addf %97, %99 : vector<2x64xf32>
    %101 = vector.extract_strided_slice %94 {offsets = [0, 128], sizes = [2, 64], strides = [1, 1]} : vector<2x192xf32> to vector<2x64xf32>
    %102 = math.tanh %100 : vector<2x64xf32>
    %103 = arith.mulf %101, %102 : vector<2x64xf32>
    %c8 = arith.constant 8 : index
    %c0_41 = arith.constant 0 : index
    %104 = vector.load %arg15[%c8, %c0_41] : memref<32x256xf32, #tpu.memory_space<vmem>>, vector<2x256xf32>
    %105 = arith.truncf %103 : vector<2x64xf32> to vector<2x64xbf16>
    %cst_42 = arith.constant dense<0.000000e+00> : vector<2x256xf32>
    %106 = tpu.matmul %105, %25, %cst_42 {dimension_numbers = #tpu.dot_dimension_numbers<[1], [0], [0], [1], [0, 0, 1, 1], [], []>} : vector<2x64xbf16>, vector<64x256xbf16>, vector<2x256xf32> -> vector<2x256xf32>
    %107 = arith.addf %104, %106 : vector<2x256xf32>
    %108 = math.tanh %107 : vector<2x256xf32>
    %109 = vector.extract_strided_slice %108 {offsets = [0, 0], sizes = [2, 192], strides = [1, 1]} : vector<2x256xf32> to vector<2x192xf32>
    %cst_43 = arith.constant 5.000000e-01 : f32
    %110 = vector.broadcast %cst_43 : f32 to vector<2x192xf32>
    %111 = arith.mulf %110, %109 : vector<2x192xf32>
    %cst_44 = arith.constant 5.000000e-01 : f32
    %112 = vector.broadcast %cst_44 : f32 to vector<2x192xf32>
    %113 = arith.addf %111, %112 : vector<2x192xf32>
    %114 = vector.extract_strided_slice %108 {offsets = [0, 192], sizes = [2, 64], strides = [1, 1]} : vector<2x256xf32> to vector<2x64xf32>
    %115 = vector.extract_strided_slice %113 {offsets = [0, 64], sizes = [2, 64], strides = [1, 1]} : vector<2x192xf32> to vector<2x64xf32>
    %116 = arith.mulf %115, %100 : vector<2x64xf32>
    %117 = vector.extract_strided_slice %113 {offsets = [0, 0], sizes = [2, 64], strides = [1, 1]} : vector<2x192xf32> to vector<2x64xf32>
    %118 = arith.mulf %117, %114 : vector<2x64xf32>
    %119 = arith.addf %116, %118 : vector<2x64xf32>
    %120 = vector.extract_strided_slice %113 {offsets = [0, 128], sizes = [2, 64], strides = [1, 1]} : vector<2x192xf32> to vector<2x64xf32>
    %121 = math.tanh %119 : vector<2x64xf32>
    %122 = arith.mulf %120, %121 : vector<2x64xf32>
    %c10 = arith.constant 10 : index
    %c0_45 = arith.constant 0 : index
    %123 = vector.load %arg15[%c10, %c0_45] : memref<32x256xf32, #tpu.memory_space<vmem>>, vector<2x256xf32>
    %124 = arith.truncf %122 : vector<2x64xf32> to vector<2x64xbf16>
    %cst_46 = arith.constant dense<0.000000e+00> : vector<2x256xf32>
    %125 = tpu.matmul %124, %25, %cst_46 {dimension_numbers = #tpu.dot_dimension_numbers<[1], [0], [0], [1], [0, 0, 1, 1], [], []>} : vector<2x64xbf16>, vector<64x256xbf16>, vector<2x256xf32> -> vector<2x256xf32>
    %126 = arith.addf %123, %125 : vector<2x256xf32>
    %127 = math.tanh %126 : vector<2x256xf32>
    %128 = vector.extract_strided_slice %127 {offsets = [0, 0], sizes = [2, 192], strides = [1, 1]} : vector<2x256xf32> to vector<2x192xf32>
    %cst_47 = arith.constant 5.000000e-01 : f32
    %129 = vector.broadcast %cst_47 : f32 to vector<2x192xf32>
    %130 = arith.mulf %129, %128 : vector<2x192xf32>
    %cst_48 = arith.constant 5.000000e-01 : f32
    %131 = vector.broadcast %cst_48 : f32 to vector<2x192xf32>
    %132 = arith.addf %130, %131 : vector<2x192xf32>
    %133 = vector.extract_strided_slice %127 {offsets = [0, 192], sizes = [2, 64], strides = [1, 1]} : vector<2x256xf32> to vector<2x64xf32>
    %134 = vector.extract_strided_slice %132 {offsets = [0, 64], sizes = [2, 64], strides = [1, 1]} : vector<2x192xf32> to vector<2x64xf32>
    %135 = arith.mulf %134, %119 : vector<2x64xf32>
    %136 = vector.extract_strided_slice %132 {offsets = [0, 0], sizes = [2, 64], strides = [1, 1]} : vector<2x192xf32> to vector<2x64xf32>
    %137 = arith.mulf %136, %133 : vector<2x64xf32>
    %138 = arith.addf %135, %137 : vector<2x64xf32>
    %139 = vector.extract_strided_slice %132 {offsets = [0, 128], sizes = [2, 64], strides = [1, 1]} : vector<2x192xf32> to vector<2x64xf32>
    %140 = math.tanh %138 : vector<2x64xf32>
    %141 = arith.mulf %139, %140 : vector<2x64xf32>
    %c12 = arith.constant 12 : index
    %c0_49 = arith.constant 0 : index
    %142 = vector.load %arg15[%c12, %c0_49] : memref<32x256xf32, #tpu.memory_space<vmem>>, vector<2x256xf32>
    %143 = arith.truncf %141 : vector<2x64xf32> to vector<2x64xbf16>
    %cst_50 = arith.constant dense<0.000000e+00> : vector<2x256xf32>
    %144 = tpu.matmul %143, %25, %cst_50 {dimension_numbers = #tpu.dot_dimension_numbers<[1], [0], [0], [1], [0, 0, 1, 1], [], []>} : vector<2x64xbf16>, vector<64x256xbf16>, vector<2x256xf32> -> vector<2x256xf32>
    %145 = arith.addf %142, %144 : vector<2x256xf32>
    %146 = math.tanh %145 : vector<2x256xf32>
    %147 = vector.extract_strided_slice %146 {offsets = [0, 0], sizes = [2, 192], strides = [1, 1]} : vector<2x256xf32> to vector<2x192xf32>
    %cst_51 = arith.constant 5.000000e-01 : f32
    %148 = vector.broadcast %cst_51 : f32 to vector<2x192xf32>
    %149 = arith.mulf %148, %147 : vector<2x192xf32>
    %cst_52 = arith.constant 5.000000e-01 : f32
    %150 = vector.broadcast %cst_52 : f32 to vector<2x192xf32>
    %151 = arith.addf %149, %150 : vector<2x192xf32>
    %152 = vector.extract_strided_slice %146 {offsets = [0, 192], sizes = [2, 64], strides = [1, 1]} : vector<2x256xf32> to vector<2x64xf32>
    %153 = vector.extract_strided_slice %151 {offsets = [0, 64], sizes = [2, 64], strides = [1, 1]} : vector<2x192xf32> to vector<2x64xf32>
    %154 = arith.mulf %153, %138 : vector<2x64xf32>
    %155 = vector.extract_strided_slice %151 {offsets = [0, 0], sizes = [2, 64], strides = [1, 1]} : vector<2x192xf32> to vector<2x64xf32>
    %156 = arith.mulf %155, %152 : vector<2x64xf32>
    %157 = arith.addf %154, %156 : vector<2x64xf32>
    %158 = vector.extract_strided_slice %151 {offsets = [0, 128], sizes = [2, 64], strides = [1, 1]} : vector<2x192xf32> to vector<2x64xf32>
    %159 = math.tanh %157 : vector<2x64xf32>
    %160 = arith.mulf %158, %159 : vector<2x64xf32>
    %c14 = arith.constant 14 : index
    %c0_53 = arith.constant 0 : index
    %161 = vector.load %arg15[%c14, %c0_53] : memref<32x256xf32, #tpu.memory_space<vmem>>, vector<2x256xf32>
    %162 = arith.truncf %160 : vector<2x64xf32> to vector<2x64xbf16>
    %cst_54 = arith.constant dense<0.000000e+00> : vector<2x256xf32>
    %163 = tpu.matmul %162, %25, %cst_54 {dimension_numbers = #tpu.dot_dimension_numbers<[1], [0], [0], [1], [0, 0, 1, 1], [], []>} : vector<2x64xbf16>, vector<64x256xbf16>, vector<2x256xf32> -> vector<2x256xf32>
    %164 = arith.addf %161, %163 : vector<2x256xf32>
    %165 = math.tanh %164 : vector<2x256xf32>
    %166 = vector.extract_strided_slice %165 {offsets = [0, 0], sizes = [2, 192], strides = [1, 1]} : vector<2x256xf32> to vector<2x192xf32>
    %cst_55 = arith.constant 5.000000e-01 : f32
    %167 = vector.broadcast %cst_55 : f32 to vector<2x192xf32>
    %168 = arith.mulf %167, %166 : vector<2x192xf32>
    %cst_56 = arith.constant 5.000000e-01 : f32
    %169 = vector.broadcast %cst_56 : f32 to vector<2x192xf32>
    %170 = arith.addf %168, %169 : vector<2x192xf32>
    %171 = vector.extract_strided_slice %165 {offsets = [0, 192], sizes = [2, 64], strides = [1, 1]} : vector<2x256xf32> to vector<2x64xf32>
    %172 = vector.extract_strided_slice %170 {offsets = [0, 64], sizes = [2, 64], strides = [1, 1]} : vector<2x192xf32> to vector<2x64xf32>
    %173 = arith.mulf %172, %157 : vector<2x64xf32>
    %174 = vector.extract_strided_slice %170 {offsets = [0, 0], sizes = [2, 64], strides = [1, 1]} : vector<2x192xf32> to vector<2x64xf32>
    %175 = arith.mulf %174, %171 : vector<2x64xf32>
    %176 = arith.addf %173, %175 : vector<2x64xf32>
    %177 = vector.extract_strided_slice %170 {offsets = [0, 128], sizes = [2, 64], strides = [1, 1]} : vector<2x192xf32> to vector<2x64xf32>
    %178 = math.tanh %176 : vector<2x64xf32>
    %179 = arith.mulf %177, %178 : vector<2x64xf32>
    %c16 = arith.constant 16 : index
    %c0_57 = arith.constant 0 : index
    %180 = vector.load %arg15[%c16, %c0_57] : memref<32x256xf32, #tpu.memory_space<vmem>>, vector<2x256xf32>
    %181 = arith.truncf %179 : vector<2x64xf32> to vector<2x64xbf16>
    %cst_58 = arith.constant dense<0.000000e+00> : vector<2x256xf32>
    %182 = tpu.matmul %181, %25, %cst_58 {dimension_numbers = #tpu.dot_dimension_numbers<[1], [0], [0], [1], [0, 0, 1, 1], [], []>} : vector<2x64xbf16>, vector<64x256xbf16>, vector<2x256xf32> -> vector<2x256xf32>
    %183 = arith.addf %180, %182 : vector<2x256xf32>
    %184 = math.tanh %183 : vector<2x256xf32>
    %185 = vector.extract_strided_slice %184 {offsets = [0, 0], sizes = [2, 192], strides = [1, 1]} : vector<2x256xf32> to vector<2x192xf32>
    %cst_59 = arith.constant 5.000000e-01 : f32
    %186 = vector.broadcast %cst_59 : f32 to vector<2x192xf32>
    %187 = arith.mulf %186, %185 : vector<2x192xf32>
    %cst_60 = arith.constant 5.000000e-01 : f32
    %188 = vector.broadcast %cst_60 : f32 to vector<2x192xf32>
    %189 = arith.addf %187, %188 : vector<2x192xf32>
    %190 = vector.extract_strided_slice %184 {offsets = [0, 192], sizes = [2, 64], strides = [1, 1]} : vector<2x256xf32> to vector<2x64xf32>
    %191 = vector.extract_strided_slice %189 {offsets = [0, 64], sizes = [2, 64], strides = [1, 1]} : vector<2x192xf32> to vector<2x64xf32>
    %192 = arith.mulf %191, %176 : vector<2x64xf32>
    %193 = vector.extract_strided_slice %189 {offsets = [0, 0], sizes = [2, 64], strides = [1, 1]} : vector<2x192xf32> to vector<2x64xf32>
    %194 = arith.mulf %193, %190 : vector<2x64xf32>
    %195 = arith.addf %192, %194 : vector<2x64xf32>
    %196 = vector.extract_strided_slice %189 {offsets = [0, 128], sizes = [2, 64], strides = [1, 1]} : vector<2x192xf32> to vector<2x64xf32>
    %197 = math.tanh %195 : vector<2x64xf32>
    %198 = arith.mulf %196, %197 : vector<2x64xf32>
    %c18 = arith.constant 18 : index
    %c0_61 = arith.constant 0 : index
    %199 = vector.load %arg15[%c18, %c0_61] : memref<32x256xf32, #tpu.memory_space<vmem>>, vector<2x256xf32>
    %200 = arith.truncf %198 : vector<2x64xf32> to vector<2x64xbf16>
    %cst_62 = arith.constant dense<0.000000e+00> : vector<2x256xf32>
    %201 = tpu.matmul %200, %25, %cst_62 {dimension_numbers = #tpu.dot_dimension_numbers<[1], [0], [0], [1], [0, 0, 1, 1], [], []>} : vector<2x64xbf16>, vector<64x256xbf16>, vector<2x256xf32> -> vector<2x256xf32>
    %202 = arith.addf %199, %201 : vector<2x256xf32>
    %203 = math.tanh %202 : vector<2x256xf32>
    %204 = vector.extract_strided_slice %203 {offsets = [0, 0], sizes = [2, 192], strides = [1, 1]} : vector<2x256xf32> to vector<2x192xf32>
    %cst_63 = arith.constant 5.000000e-01 : f32
    %205 = vector.broadcast %cst_63 : f32 to vector<2x192xf32>
    %206 = arith.mulf %205, %204 : vector<2x192xf32>
    %cst_64 = arith.constant 5.000000e-01 : f32
    %207 = vector.broadcast %cst_64 : f32 to vector<2x192xf32>
    %208 = arith.addf %206, %207 : vector<2x192xf32>
    %209 = vector.extract_strided_slice %203 {offsets = [0, 192], sizes = [2, 64], strides = [1, 1]} : vector<2x256xf32> to vector<2x64xf32>
    %210 = vector.extract_strided_slice %208 {offsets = [0, 64], sizes = [2, 64], strides = [1, 1]} : vector<2x192xf32> to vector<2x64xf32>
    %211 = arith.mulf %210, %195 : vector<2x64xf32>
    %212 = vector.extract_strided_slice %208 {offsets = [0, 0], sizes = [2, 64], strides = [1, 1]} : vector<2x192xf32> to vector<2x64xf32>
    %213 = arith.mulf %212, %209 : vector<2x64xf32>
    %214 = arith.addf %211, %213 : vector<2x64xf32>
    %215 = vector.extract_strided_slice %208 {offsets = [0, 128], sizes = [2, 64], strides = [1, 1]} : vector<2x192xf32> to vector<2x64xf32>
    %216 = math.tanh %214 : vector<2x64xf32>
    %217 = arith.mulf %215, %216 : vector<2x64xf32>
    %c20 = arith.constant 20 : index
    %c0_65 = arith.constant 0 : index
    %218 = vector.load %arg15[%c20, %c0_65] : memref<32x256xf32, #tpu.memory_space<vmem>>, vector<2x256xf32>
    %219 = arith.truncf %217 : vector<2x64xf32> to vector<2x64xbf16>
    %cst_66 = arith.constant dense<0.000000e+00> : vector<2x256xf32>
    %220 = tpu.matmul %219, %25, %cst_66 {dimension_numbers = #tpu.dot_dimension_numbers<[1], [0], [0], [1], [0, 0, 1, 1], [], []>} : vector<2x64xbf16>, vector<64x256xbf16>, vector<2x256xf32> -> vector<2x256xf32>
    %221 = arith.addf %218, %220 : vector<2x256xf32>
    %222 = math.tanh %221 : vector<2x256xf32>
    %223 = vector.extract_strided_slice %222 {offsets = [0, 0], sizes = [2, 192], strides = [1, 1]} : vector<2x256xf32> to vector<2x192xf32>
    %cst_67 = arith.constant 5.000000e-01 : f32
    %224 = vector.broadcast %cst_67 : f32 to vector<2x192xf32>
    %225 = arith.mulf %224, %223 : vector<2x192xf32>
    %cst_68 = arith.constant 5.000000e-01 : f32
    %226 = vector.broadcast %cst_68 : f32 to vector<2x192xf32>
    %227 = arith.addf %225, %226 : vector<2x192xf32>
    %228 = vector.extract_strided_slice %222 {offsets = [0, 192], sizes = [2, 64], strides = [1, 1]} : vector<2x256xf32> to vector<2x64xf32>
    %229 = vector.extract_strided_slice %227 {offsets = [0, 64], sizes = [2, 64], strides = [1, 1]} : vector<2x192xf32> to vector<2x64xf32>
    %230 = arith.mulf %229, %214 : vector<2x64xf32>
    %231 = vector.extract_strided_slice %227 {offsets = [0, 0], sizes = [2, 64], strides = [1, 1]} : vector<2x192xf32> to vector<2x64xf32>
    %232 = arith.mulf %231, %228 : vector<2x64xf32>
    %233 = arith.addf %230, %232 : vector<2x64xf32>
    %234 = vector.extract_strided_slice %227 {offsets = [0, 128], sizes = [2, 64], strides = [1, 1]} : vector<2x192xf32> to vector<2x64xf32>
    %235 = math.tanh %233 : vector<2x64xf32>
    %236 = arith.mulf %234, %235 : vector<2x64xf32>
    %c22 = arith.constant 22 : index
    %c0_69 = arith.constant 0 : index
    %237 = vector.load %arg15[%c22, %c0_69] : memref<32x256xf32, #tpu.memory_space<vmem>>, vector<2x256xf32>
    %238 = arith.truncf %236 : vector<2x64xf32> to vector<2x64xbf16>
    %cst_70 = arith.constant dense<0.000000e+00> : vector<2x256xf32>
    %239 = tpu.matmul %238, %25, %cst_70 {dimension_numbers = #tpu.dot_dimension_numbers<[1], [0], [0], [1], [0, 0, 1, 1], [], []>} : vector<2x64xbf16>, vector<64x256xbf16>, vector<2x256xf32> -> vector<2x256xf32>
    %240 = arith.addf %237, %239 : vector<2x256xf32>
    %241 = math.tanh %240 : vector<2x256xf32>
    %242 = vector.extract_strided_slice %241 {offsets = [0, 0], sizes = [2, 192], strides = [1, 1]} : vector<2x256xf32> to vector<2x192xf32>
    %cst_71 = arith.constant 5.000000e-01 : f32
    %243 = vector.broadcast %cst_71 : f32 to vector<2x192xf32>
    %244 = arith.mulf %243, %242 : vector<2x192xf32>
    %cst_72 = arith.constant 5.000000e-01 : f32
    %245 = vector.broadcast %cst_72 : f32 to vector<2x192xf32>
    %246 = arith.addf %244, %245 : vector<2x192xf32>
    %247 = vector.extract_strided_slice %241 {offsets = [0, 192], sizes = [2, 64], strides = [1, 1]} : vector<2x256xf32> to vector<2x64xf32>
    %248 = vector.extract_strided_slice %246 {offsets = [0, 64], sizes = [2, 64], strides = [1, 1]} : vector<2x192xf32> to vector<2x64xf32>
    %249 = arith.mulf %248, %233 : vector<2x64xf32>
    %250 = vector.extract_strided_slice %246 {offsets = [0, 0], sizes = [2, 64], strides = [1, 1]} : vector<2x192xf32> to vector<2x64xf32>
    %251 = arith.mulf %250, %247 : vector<2x64xf32>
    %252 = arith.addf %249, %251 : vector<2x64xf32>
    %253 = vector.extract_strided_slice %246 {offsets = [0, 128], sizes = [2, 64], strides = [1, 1]} : vector<2x192xf32> to vector<2x64xf32>
    %254 = math.tanh %252 : vector<2x64xf32>
    %255 = arith.mulf %253, %254 : vector<2x64xf32>
    %c24 = arith.constant 24 : index
    %c0_73 = arith.constant 0 : index
    %256 = vector.load %arg15[%c24, %c0_73] : memref<32x256xf32, #tpu.memory_space<vmem>>, vector<2x256xf32>
    %257 = arith.truncf %255 : vector<2x64xf32> to vector<2x64xbf16>
    %cst_74 = arith.constant dense<0.000000e+00> : vector<2x256xf32>
    %258 = tpu.matmul %257, %25, %cst_74 {dimension_numbers = #tpu.dot_dimension_numbers<[1], [0], [0], [1], [0, 0, 1, 1], [], []>} : vector<2x64xbf16>, vector<64x256xbf16>, vector<2x256xf32> -> vector<2x256xf32>
    %259 = arith.addf %256, %258 : vector<2x256xf32>
    %260 = math.tanh %259 : vector<2x256xf32>
    %261 = vector.extract_strided_slice %260 {offsets = [0, 0], sizes = [2, 192], strides = [1, 1]} : vector<2x256xf32> to vector<2x192xf32>
    %cst_75 = arith.constant 5.000000e-01 : f32
    %262 = vector.broadcast %cst_75 : f32 to vector<2x192xf32>
    %263 = arith.mulf %262, %261 : vector<2x192xf32>
    %cst_76 = arith.constant 5.000000e-01 : f32
    %264 = vector.broadcast %cst_76 : f32 to vector<2x192xf32>
    %265 = arith.addf %263, %264 : vector<2x192xf32>
    %266 = vector.extract_strided_slice %260 {offsets = [0, 192], sizes = [2, 64], strides = [1, 1]} : vector<2x256xf32> to vector<2x64xf32>
    %267 = vector.extract_strided_slice %265 {offsets = [0, 64], sizes = [2, 64], strides = [1, 1]} : vector<2x192xf32> to vector<2x64xf32>
    %268 = arith.mulf %267, %252 : vector<2x64xf32>
    %269 = vector.extract_strided_slice %265 {offsets = [0, 0], sizes = [2, 64], strides = [1, 1]} : vector<2x192xf32> to vector<2x64xf32>
    %270 = arith.mulf %269, %266 : vector<2x64xf32>
    %271 = arith.addf %268, %270 : vector<2x64xf32>
    %272 = vector.extract_strided_slice %265 {offsets = [0, 128], sizes = [2, 64], strides = [1, 1]} : vector<2x192xf32> to vector<2x64xf32>
    %273 = math.tanh %271 : vector<2x64xf32>
    %274 = arith.mulf %272, %273 : vector<2x64xf32>
    %c26 = arith.constant 26 : index
    %c0_77 = arith.constant 0 : index
    %275 = vector.load %arg15[%c26, %c0_77] : memref<32x256xf32, #tpu.memory_space<vmem>>, vector<2x256xf32>
    %276 = arith.truncf %274 : vector<2x64xf32> to vector<2x64xbf16>
    %cst_78 = arith.constant dense<0.000000e+00> : vector<2x256xf32>
    %277 = tpu.matmul %276, %25, %cst_78 {dimension_numbers = #tpu.dot_dimension_numbers<[1], [0], [0], [1], [0, 0, 1, 1], [], []>} : vector<2x64xbf16>, vector<64x256xbf16>, vector<2x256xf32> -> vector<2x256xf32>
    %278 = arith.addf %275, %277 : vector<2x256xf32>
    %279 = math.tanh %278 : vector<2x256xf32>
    %280 = vector.extract_strided_slice %279 {offsets = [0, 0], sizes = [2, 192], strides = [1, 1]} : vector<2x256xf32> to vector<2x192xf32>
    %cst_79 = arith.constant 5.000000e-01 : f32
    %281 = vector.broadcast %cst_79 : f32 to vector<2x192xf32>
    %282 = arith.mulf %281, %280 : vector<2x192xf32>
    %cst_80 = arith.constant 5.000000e-01 : f32
    %283 = vector.broadcast %cst_80 : f32 to vector<2x192xf32>
    %284 = arith.addf %282, %283 : vector<2x192xf32>
    %285 = vector.extract_strided_slice %279 {offsets = [0, 192], sizes = [2, 64], strides = [1, 1]} : vector<2x256xf32> to vector<2x64xf32>
    %286 = vector.extract_strided_slice %284 {offsets = [0, 64], sizes = [2, 64], strides = [1, 1]} : vector<2x192xf32> to vector<2x64xf32>
    %287 = arith.mulf %286, %271 : vector<2x64xf32>
    %288 = vector.extract_strided_slice %284 {offsets = [0, 0], sizes = [2, 64], strides = [1, 1]} : vector<2x192xf32> to vector<2x64xf32>
    %289 = arith.mulf %288, %285 : vector<2x64xf32>
    %290 = arith.addf %287, %289 : vector<2x64xf32>
    %291 = vector.extract_strided_slice %284 {offsets = [0, 128], sizes = [2, 64], strides = [1, 1]} : vector<2x192xf32> to vector<2x64xf32>
    %292 = math.tanh %290 : vector<2x64xf32>
    %293 = arith.mulf %291, %292 : vector<2x64xf32>
    %c28 = arith.constant 28 : index
    %c0_81 = arith.constant 0 : index
    %294 = vector.load %arg15[%c28, %c0_81] : memref<32x256xf32, #tpu.memory_space<vmem>>, vector<2x256xf32>
    %295 = arith.truncf %293 : vector<2x64xf32> to vector<2x64xbf16>
    %cst_82 = arith.constant dense<0.000000e+00> : vector<2x256xf32>
    %296 = tpu.matmul %295, %25, %cst_82 {dimension_numbers = #tpu.dot_dimension_numbers<[1], [0], [0], [1], [0, 0, 1, 1], [], []>} : vector<2x64xbf16>, vector<64x256xbf16>, vector<2x256xf32> -> vector<2x256xf32>
    %297 = arith.addf %294, %296 : vector<2x256xf32>
    %298 = math.tanh %297 : vector<2x256xf32>
    %299 = vector.extract_strided_slice %298 {offsets = [0, 0], sizes = [2, 192], strides = [1, 1]} : vector<2x256xf32> to vector<2x192xf32>
    %cst_83 = arith.constant 5.000000e-01 : f32
    %300 = vector.broadcast %cst_83 : f32 to vector<2x192xf32>
    %301 = arith.mulf %300, %299 : vector<2x192xf32>
    %cst_84 = arith.constant 5.000000e-01 : f32
    %302 = vector.broadcast %cst_84 : f32 to vector<2x192xf32>
    %303 = arith.addf %301, %302 : vector<2x192xf32>
    %304 = vector.extract_strided_slice %298 {offsets = [0, 192], sizes = [2, 64], strides = [1, 1]} : vector<2x256xf32> to vector<2x64xf32>
    %305 = vector.extract_strided_slice %303 {offsets = [0, 64], sizes = [2, 64], strides = [1, 1]} : vector<2x192xf32> to vector<2x64xf32>
    %306 = arith.mulf %305, %290 : vector<2x64xf32>
    %307 = vector.extract_strided_slice %303 {offsets = [0, 0], sizes = [2, 64], strides = [1, 1]} : vector<2x192xf32> to vector<2x64xf32>
    %308 = arith.mulf %307, %304 : vector<2x64xf32>
    %309 = arith.addf %306, %308 : vector<2x64xf32>
    %310 = vector.extract_strided_slice %303 {offsets = [0, 128], sizes = [2, 64], strides = [1, 1]} : vector<2x192xf32> to vector<2x64xf32>
    %311 = math.tanh %309 : vector<2x64xf32>
    %312 = arith.mulf %310, %311 : vector<2x64xf32>
    %c30 = arith.constant 30 : index
    %c0_85 = arith.constant 0 : index
    %313 = vector.load %arg15[%c30, %c0_85] : memref<32x256xf32, #tpu.memory_space<vmem>>, vector<2x256xf32>
    %314 = arith.truncf %312 : vector<2x64xf32> to vector<2x64xbf16>
    %cst_86 = arith.constant dense<0.000000e+00> : vector<2x256xf32>
    %315 = tpu.matmul %314, %25, %cst_86 {dimension_numbers = #tpu.dot_dimension_numbers<[1], [0], [0], [1], [0, 0, 1, 1], [], []>} : vector<2x64xbf16>, vector<64x256xbf16>, vector<2x256xf32> -> vector<2x256xf32>
    %316 = arith.addf %313, %315 : vector<2x256xf32>
    %317 = math.tanh %316 : vector<2x256xf32>
    %318 = vector.extract_strided_slice %317 {offsets = [0, 0], sizes = [2, 192], strides = [1, 1]} : vector<2x256xf32> to vector<2x192xf32>
    %cst_87 = arith.constant 5.000000e-01 : f32
    %319 = vector.broadcast %cst_87 : f32 to vector<2x192xf32>
    %320 = arith.mulf %319, %318 : vector<2x192xf32>
    %cst_88 = arith.constant 5.000000e-01 : f32
    %321 = vector.broadcast %cst_88 : f32 to vector<2x192xf32>
    %322 = arith.addf %320, %321 : vector<2x192xf32>
    %323 = vector.extract_strided_slice %317 {offsets = [0, 192], sizes = [2, 64], strides = [1, 1]} : vector<2x256xf32> to vector<2x64xf32>
    %324 = vector.extract_strided_slice %322 {offsets = [0, 64], sizes = [2, 64], strides = [1, 1]} : vector<2x192xf32> to vector<2x64xf32>
    %325 = arith.mulf %324, %309 : vector<2x64xf32>
    %326 = vector.extract_strided_slice %322 {offsets = [0, 0], sizes = [2, 64], strides = [1, 1]} : vector<2x192xf32> to vector<2x64xf32>
    %327 = arith.mulf %326, %323 : vector<2x64xf32>
    %328 = arith.addf %325, %327 : vector<2x64xf32>
    %329 = vector.extract_strided_slice %322 {offsets = [0, 128], sizes = [2, 64], strides = [1, 1]} : vector<2x192xf32> to vector<2x64xf32>
    %330 = math.tanh %328 : vector<2x64xf32>
    %331 = arith.mulf %329, %330 : vector<2x64xf32>
    %332 = math.tanh %24 : vector<2x256xf32>
    %333 = vector.extract_strided_slice %332 {offsets = [0, 0], sizes = [2, 192], strides = [1, 1]} : vector<2x256xf32> to vector<2x192xf32>
    %cst_89 = arith.constant 5.000000e-01 : f32
    %334 = vector.broadcast %cst_89 : f32 to vector<2x192xf32>
    %335 = arith.mulf %334, %333 : vector<2x192xf32>
    %cst_90 = arith.constant 5.000000e-01 : f32
    %336 = vector.broadcast %cst_90 : f32 to vector<2x192xf32>
    %337 = arith.addf %335, %336 : vector<2x192xf32>
    %338 = vector.extract_strided_slice %337 {offsets = [0, 0], sizes = [2, 64], strides = [1, 1]} : vector<2x192xf32> to vector<2x64xf32>
    %339 = vector.extract_strided_slice %332 {offsets = [0, 192], sizes = [2, 64], strides = [1, 1]} : vector<2x256xf32> to vector<2x64xf32>
    %340 = arith.mulf %338, %339 : vector<2x64xf32>
    %341 = vector.extract_strided_slice %337 {offsets = [0, 128], sizes = [2, 64], strides = [1, 1]} : vector<2x192xf32> to vector<2x64xf32>
    %342 = math.tanh %340 : vector<2x64xf32>
    %343 = arith.mulf %341, %342 : vector<2x64xf32>
    %c0_91 = arith.constant 0 : index
    %c0_92 = arith.constant 0 : index
    %344 = vector.load %arg9[%c0_91, %c0_92] : memref<64x64xf32, #tpu.memory_space<vmem>>, vector<64x64xf32>
    %cst_93 = arith.constant dense<0.000000e+00> : vector<2x64xf32>
    %345 = tpu.matmul %331, %344, %cst_93 {dimension_numbers = #tpu.dot_dimension_numbers<[1], [0], [0], [1], [0, 0, 1, 1], [], []>} : vector<2x64xf32>, vector<64x64xf32>, vector<2x64xf32> -> vector<2x64xf32>
    %c0_94 = arith.constant 0 : index
    %c0_95 = arith.constant 0 : index
    %346 = vector.load %arg10[%c0_94, %c0_95] : memref<64x64xf32, #tpu.memory_space<vmem>>, vector<64x64xf32>
    %cst_96 = arith.constant dense<0.000000e+00> : vector<2x64xf32>
    %347 = tpu.matmul %343, %346, %cst_96 {dimension_numbers = #tpu.dot_dimension_numbers<[1], [0], [0], [1], [0, 0, 1, 1], [], []>} : vector<2x64xf32>, vector<64x64xf32>, vector<2x64xf32> -> vector<2x64xf32>
    %348 = arith.addf %345, %347 : vector<2x64xf32>
    %c0_97 = arith.constant 0 : index
    %c0_98 = arith.constant 0 : index
    %349 = vector.load %arg11[%c0_97, %c0_98] : memref<1x64xf32, #tpu.memory_space<vmem>>, vector<1x64xf32>
    %350 = vector.broadcast %349 : vector<1x64xf32> to vector<2x64xf32>
    %351 = arith.addf %348, %350 : vector<2x64xf32>
    %cst_99 = arith.constant 0.000000e+00 : f32
    %352 = vector.broadcast %cst_99 : f32 to vector<2x64xf32>
    %353 = arith.maximumf %351, %352 : vector<2x64xf32>
    %c0_100 = arith.constant 0 : index
    %c0_101 = arith.constant 0 : index
    %354 = vector.load %arg12[%c0_100, %c0_101] : memref<64x2xf32, #tpu.memory_space<vmem>>, vector<64x2xf32>
    %cst_102 = arith.constant dense<0.000000e+00> : vector<2x2xf32>
    %355 = tpu.matmul %353, %354, %cst_102 {dimension_numbers = #tpu.dot_dimension_numbers<[1], [0], [0], [1], [0, 0, 1, 1], [], []>} : vector<2x64xf32>, vector<64x2xf32>, vector<2x2xf32> -> vector<2x2xf32>
    %c0_103 = arith.constant 0 : index
    %c0_104 = arith.constant 0 : index
    %356 = vector.load %arg13[%c0_103, %c0_104] : memref<1x2xf32, #tpu.memory_space<vmem>>, vector<1x2xf32>
    %357 = vector.broadcast %356 : vector<1x2xf32> to vector<2x2xf32>
    %358 = arith.addf %355, %357 : vector<2x2xf32>
    %c0_105 = arith.constant 0 : index
    %c0_106 = arith.constant 0 : index
    %359 = vector.load %arg14[%c0_105, %c0_106] : memref<2x2xf32, #tpu.memory_space<vmem>>, vector<2x2xf32>
    tpu.vector_store %arg14[%c0_105, %c0_106], %358 {strides = array<i32>} : memref<2x2xf32, #tpu.memory_space<vmem>>, vector<2x2xf32>,
    return
  }
}

</mosaic_0001>

<llo_original>
// kernel: tpu_custom_call.1
$region0: #{tpu_custom_call.1}
  #allocation0 [shape = 'u32[]', space=smem, size = 0x4, offset = 0x4, fixed_abs, tag = 'smem constant byte address 0x4 - core index']
  #allocation1 [shape = 'u32[144,128]{1,0:T(1,128)}', space=vmem, size = 0x12000, scoped, tag = 'internal scratch']
  #allocation2 [shape = 'f32[32,256]{1,0:T(8,128)}', space=vmem, size = 0x8000, scoped, tag = 'scratch operand']
  %s0 = inlined_call_operand.hbm [shape: bf16[32,35], index: 0, kind: input, shape index: {}]
  %s1 = inlined_call_operand.vmem [shape: bf16[35,32], index: 1, kind: input, shape index: {}]
  %s2 = inlined_call_operand.hbm [shape: f32[1,32], index: 2, kind: input, shape index: {}]
  %s3 = inlined_call_operand.hbm [shape: f32[1,32], index: 3, kind: input, shape index: {}]
  %s4 = inlined_call_operand.hbm [shape: bf16[32,256], index: 4, kind: input, shape index: {}]
  %s5 = inlined_call_operand.hbm [shape: f32[1,256], index: 5, kind: input, shape index: {}]
  %s6 = inlined_call_operand.hbm [shape: bf16[32,256], index: 6, kind: input, shape index: {}]
  %s7 = inlined_call_operand.hbm [shape: f32[1,256], index: 7, kind: input, shape index: {}]
  %s8 = inlined_call_operand.vmem [shape: bf16[64,256], index: 8, kind: input, shape index: {}]
  %s9 = inlined_call_operand.vmem [shape: f32[64,64], index: 9, kind: input, shape index: {}]
  %s10 = inlined_call_operand.hbm [shape: f32[64,64], index: 10, kind: input, shape index: {}]
  %s11 = inlined_call_operand.vmem [shape: f32[1,64], index: 11, kind: input, shape index: {}]
  %s12 = inlined_call_operand.vmem [shape: f32[64,2], index: 12, kind: input, shape index: {}]
  %s13 = inlined_call_operand.vmem [shape: f32[1,2], index: 13, kind: input, shape index: {}]
  %s14 = inlined_call_operand.hbm [shape: f32[2,2], index: 14, kind: output, shape index: {}]
  %s15 = sld [smem:[#allocation0]]
  $region98: #{tpu_custom_call.1} parent=0
    _
  %s17 = ssub.s32 1, %s15
  %s18 = scalar_select 0, %s17, %s15
  $region1: #{tpu_custom_call.1} parent=0
    #allocation3 [shape = 'u8[8192]{0}', space=vmem, size = 0x2000, scoped, tag = 'input window, operand 0, single buffered']
    #allocation4 [shape = 's32[1]{0}', space=sflag, size = 0x4, scoped, tag = 'scoped memory for tpu_custom_call.1']
    #allocation5 [shape = 's32[1]{0}', space=sflag, size = 0x4, scoped, tag = 'scoped memory for tpu_custom_call.1']
    #allocation6 [shape = 'u8[512]{0}', space=vmem, size = 0x400, scoped, tag = 'input window, operand 2, single buffered']
    #allocation7 [shape = 's32[1]{0}', space=sflag, size = 0x4, scoped, tag = 'scoped memory for tpu_custom_call.1']
    #allocation8 [shape = 'u8[512]{0}', space=vmem, size = 0x400, scoped, tag = 'input window, operand 3, single buffered']
    #allocation9 [shape = 'u8[16384]{0}', space=vmem, size = 0x4000, scoped, tag = 'input window, operand 4, single buffered']
    #allocation10 [shape = 's32[1]{0}', space=sflag, size = 0x4, scoped, tag = 'scoped memory for tpu_custom_call.1']
    #allocation11 [shape = 'u8[1024]{0}', space=vmem, size = 0x400, scoped, tag = 'input window, operand 5, single buffered']
    #allocation12 [shape = 'u8[16384]{0}', space=vmem, size = 0x4000, scoped, tag = 'input window, operand 6, single buffered']
    #allocation13 [shape = 's32[1]{0}', space=sflag, size = 0x4, scoped, tag = 'scoped memory for tpu_custom_call.1']
    #allocation14 [shape = 'u8[1024]{0}', space=vmem, size = 0x400, scoped, tag = 'input window, operand 7, single buffered']
    #allocation15 [shape = 'u8[32768]{0}', space=vmem, size = 0x8000, scoped, tag = 'input window, operand 10, single buffered']
    #allocation16 [shape = 's32[1]{0}', space=sflag, size = 0x4, scoped, tag = 'scoped memory for tpu_custom_call.1']
    #allocation17 [shape = 'u8[1024]{0}', space=vmem, size = 0x400, scoped, tag = 'output window, operand 0, single buffered']
    %19 = vsyncpa [#allocation4], 0
    %20 = vsyncpa [#allocation7], 0
    %21 = vsyncpa [#allocation10], 0
    %22 = vsyncpa [#allocation13], 0
    %23 = vsyncpa [#allocation16], 0
    %24 = vsyncpa [#allocation5], 0
    // Predicated region
    $region2: #{tpu_custom_call.1} parent=1 // pred_check
      _
    $region3: #{tpu_custom_call.1} parent=1 // pred_check_branch
      %26 = sbr.rel (0) target = $region5
    $region4: #{tpu_custom_call.1} parent=1 // pred_region
      %s28 = ssub.s32 256, 256
      %29 = vsyncadd [#allocation4], %s28
      %s30 = sshll.u32 [#allocation3], 4
      %s31 = int_to_ptr.vmem [resolvable:$true] %s30
      %36 = dma.hbm_to_vmem [thread:$0]  %s0, 256, %s31, [#allocation4], 64, 64, 4
    $region5: #{tpu_custom_call.1} parent=1 // pred_fallthru
      _
    // Predicated region
    $region6: #{tpu_custom_call.1} parent=1 // pred_check
      _
    $region7: #{tpu_custom_call.1} parent=1 // pred_check_branch
      %38 = sbr.rel (0) target = $region9
    $region8: #{tpu_custom_call.1} parent=1 // pred_region
      _
    $region9: #{tpu_custom_call.1} parent=1 // pred_fallthru
      _
    // Predicated region
    $region10: #{tpu_custom_call.1} parent=1 // pred_check
      _
    $region11: #{tpu_custom_call.1} parent=1 // pred_check_branch
      %40 = sbr.rel (0) target = $region13
    $region12: #{tpu_custom_call.1} parent=1 // pred_region
      %s42 = ssub.s32 16, 16
      %43 = vsyncadd [#allocation7], %s42
      %s45 = sshll.u32 [#allocation6], 4
      %s46 = int_to_ptr.vmem [resolvable:$true] %s45
      %48 = dma.hbm_to_vmem [thread:$0]  %s2, 16, %s46, [#allocation7]
    $region13: #{tpu_custom_call.1} parent=1 // pred_fallthru
      _
    // Predicated region
    $region14: #{tpu_custom_call.1} parent=1 // pred_check
      _
    $region15: #{tpu_custom_call.1} parent=1 // pred_check_branch
      %50 = sbr.rel (0) target = $region17
    $region16: #{tpu_custom_call.1} parent=1 // pred_region
      %s52 = ssub.s32 16, 16
      %53 = vsyncadd [#allocation7], %s52
      %s55 = sshll.u32 [#allocation8], 4
      %s56 = int_to_ptr.vmem [resolvable:$true] %s55
      %58 = dma.hbm_to_vmem [thread:$0]  %s3, 16, %s56, [#allocation7]
    $region17: #{tpu_custom_call.1} parent=1 // pred_fallthru
      _
    // Predicated region
    $region18: #{tpu_custom_call.1} parent=1 // pred_check
      _
    $region19: #{tpu_custom_call.1} parent=1 // pred_check_branch
      %60 = sbr.rel (0) target = $region21
    $region20: #{tpu_custom_call.1} parent=1 // pred_region
      %s62 = ssub.s32 512, 512
      %63 = vsyncadd [#allocation10], %s62
      %s64 = sshll.u32 [#allocation9], 4
      %s65 = int_to_ptr.vmem [resolvable:$true] %s64
      %70 = dma.hbm_to_vmem [thread:$0]  %s4, 512, %s65, [#allocation10], 128, 128, 8
    $region21: #{tpu_custom_call.1} parent=1 // pred_fallthru
      _
    // Predicated region
    $region22: #{tpu_custom_call.1} parent=1 // pred_check
      _
    $region23: #{tpu_custom_call.1} parent=1 // pred_check_branch
      %72 = sbr.rel (0) target = $region25
    $region24: #{tpu_custom_call.1} parent=1 // pred_region
      %s74 = ssub.s32 32, 32
      %75 = vsyncadd [#allocation10], %s74
      %s77 = sshll.u32 [#allocation11], 4
      %s78 = int_to_ptr.vmem [resolvable:$true] %s77
      %80 = dma.hbm_to_vmem [thread:$0]  %s5, 32, %s78, [#allocation10]
    $region25: #{tpu_custom_call.1} parent=1 // pred_fallthru
      _
    // Predicated region
    $region26: #{tpu_custom_call.1} parent=1 // pred_check
      _
    $region27: #{tpu_custom_call.1} parent=1 // pred_check_branch
      %82 = sbr.rel (0) target = $region29
    $region28: #{tpu_custom_call.1} parent=1 // pred_region
      %s84 = ssub.s32 512, 512
      %85 = vsyncadd [#allocation13], %s84
      %s86 = sshll.u32 [#allocation12], 4
      %s87 = int_to_ptr.vmem [resolvable:$true] %s86
      %92 = dma.hbm_to_vmem [thread:$0]  %s6, 512, %s87, [#allocation13], 128, 128, 8
    $region29: #{tpu_custom_call.1} parent=1 // pred_fallthru
      _
    // Predicated region
    $region30: #{tpu_custom_call.1} parent=1 // pred_check
      _
    $region31: #{tpu_custom_call.1} parent=1 // pred_check_branch
      %94 = sbr.rel (0) target = $region33
    $region32: #{tpu_custom_call.1} parent=1 // pred_region
      %s96 = ssub.s32 32, 32
      %97 = vsyncadd [#allocation13], %s96
      %s99 = sshll.u32 [#allocation14], 4
      %s100 = int_to_ptr.vmem [resolvable:$true] %s99
      %102 = dma.hbm_to_vmem [thread:$0]  %s7, 32, %s100, [#allocation13]
    $region33: #{tpu_custom_call.1} parent=1 // pred_fallthru
      _
    // Predicated region
    $region34: #{tpu_custom_call.1} parent=1 // pred_check
      _
    $region35: #{tpu_custom_call.1} parent=1 // pred_check_branch
      %104 = sbr.rel (0) target = $region37
    $region36: #{tpu_custom_call.1} parent=1 // pred_region
      _
    $region37: #{tpu_custom_call.1} parent=1 // pred_fallthru
      _
    // Predicated region
    $region38: #{tpu_custom_call.1} parent=1 // pred_check
      _
    $region39: #{tpu_custom_call.1} parent=1 // pred_check_branch
      %106 = sbr.rel (0) target = $region41
    $region40: #{tpu_custom_call.1} parent=1 // pred_region
      _
    $region41: #{tpu_custom_call.1} parent=1 // pred_fallthru
      _
    // Predicated region
    $region42: #{tpu_custom_call.1} parent=1 // pred_check
      _
    $region43: #{tpu_custom_call.1} parent=1 // pred_check_branch
      %108 = sbr.rel (0) target = $region45
    $region44: #{tpu_custom_call.1} parent=1 // pred_region
      %s110 = ssub.s32 1024, 1024
      %111 = vsyncadd [#allocation16], %s110
      %s112 = sshll.u32 [#allocation15], 4
      %s113 = int_to_ptr.vmem [resolvable:$true] %s112
      %118 = dma.hbm_to_vmem [thread:$0]  %s10, 1024, %s113, [#allocation16], 128, 128, 8
    $region45: #{tpu_custom_call.1} parent=1 // pred_fallthru
      _
    // Predicated region
    $region46: #{tpu_custom_call.1} parent=1 // pred_check
      _
    $region47: #{tpu_custom_call.1} parent=1 // pred_check_branch
      %120 = sbr.rel (0) target = $region49
    $region48: #{tpu_custom_call.1} parent=1 // pred_region
      _
    $region49: #{tpu_custom_call.1} parent=1 // pred_fallthru
      _
    // Predicated region
    $region50: #{tpu_custom_call.1} parent=1 // pred_check
      _
    $region51: #{tpu_custom_call.1} parent=1 // pred_check_branch
      %122 = sbr.rel (0) target = $region53
    $region52: #{tpu_custom_call.1} parent=1 // pred_region
      _
    $region53: #{tpu_custom_call.1} parent=1 // pred_fallthru
      _
    // Predicated region
    $region54: #{tpu_custom_call.1} parent=1 // pred_check
      _
    $region55: #{tpu_custom_call.1} parent=1 // pred_check_branch
      %124 = sbr.rel (0) target = $region57
    $region56: #{tpu_custom_call.1} parent=1 // pred_region
      _
    $region57: #{tpu_custom_call.1} parent=1 // pred_fallthru
      _
    // Predicated region
    $region58: #{tpu_custom_call.1} parent=1 // pred_check
      _
    $region59: #{tpu_custom_call.1} parent=1 // pred_check_branch
      %126 = sbr.rel (0) target = $region61
    $region60: #{tpu_custom_call.1} parent=1 // pred_region
      %127 = dma.done [#allocation4], 256
    $region61: #{tpu_custom_call.1} parent=1 // pred_fallthru
      _
    // Predicated region
    $region62: #{tpu_custom_call.1} parent=1 // pred_check
      _
    $region63: #{tpu_custom_call.1} parent=1 // pred_check_branch
      %129 = sbr.rel (0) target = $region65
    $region64: #{tpu_custom_call.1} parent=1 // pred_region
      %130 = dma.done [#allocation7], 16
    $region65: #{tpu_custom_call.1} parent=1 // pred_fallthru
      _
    // Predicated region
    $region66: #{tpu_custom_call.1} parent=1 // pred_check
      _
    $region67: #{tpu_custom_call.1} parent=1 // pred_check_branch
      %132 = sbr.rel (0) target = $region69
    $region68: #{tpu_custom_call.1} parent=1 // pred_region
      %133 = dma.done [#allocation7], 16
    $region69: #{tpu_custom_call.1} parent=1 // pred_fallthru
      _
    // Predicated region
    $region70: #{tpu_custom_call.1} parent=1 // pred_check
      _
    $region71: #{tpu_custom_call.1} parent=1 // pred_check_branch
      %135 = sbr.rel (0) target = $region73
    $region72: #{tpu_custom_call.1} parent=1 // pred_region
      %136 = dma.done [#allocation10], 512
    $region73: #{tpu_custom_call.1} parent=1 // pred_fallthru
      _
    // Predicated region
    $region74: #{tpu_custom_call.1} parent=1 // pred_check
      _
    $region75: #{tpu_custom_call.1} parent=1 // pred_check_branch
      %138 = sbr.rel (0) target = $region77
    $region76: #{tpu_custom_call.1} parent=1 // pred_region
      %139 = dma.done [#allocation10], 32
    $region77: #{tpu_custom_call.1} parent=1 // pred_fallthru
      _
    // Predicated region
    $region78: #{tpu_custom_call.1} parent=1 // pred_check
      _
    $region79: #{tpu_custom_call.1} parent=1 // pred_check_branch
      %141 = sbr.rel (0) target = $region81
    $region80: #{tpu_custom_call.1} parent=1 // pred_region
      %142 = dma.done [#allocation13], 512
    $region81: #{tpu_custom_call.1} parent=1 // pred_fallthru
      _
    // Predicated region
    $region82: #{tpu_custom_call.1} parent=1 // pred_check
      _
    $region83: #{tpu_custom_call.1} parent=1 // pred_check_branch
      %144 = sbr.rel (0) target = $region85
    $region84: #{tpu_custom_call.1} parent=1 // pred_region
      %145 = dma.done [#allocation13], 32
    $region85: #{tpu_custom_call.1} parent=1 // pred_fallthru
      _
    // Predicated region
    $region86: #{tpu_custom_call.1} parent=1 // pred_check
      _
    $region87: #{tpu_custom_call.1} parent=1 // pred_check_branch
      %147 = sbr.rel (0) target = $region89
    $region88: #{tpu_custom_call.1} parent=1 // pred_region
      %148 = dma.done [#allocation16], 1024
    $region89: #{tpu_custom_call.1} parent=1 // pred_fallthru
      _
    %v150 = vld [vmem:[#allocation3] sm:$0xf]
    %v151 = vld [vmem:[#allocation3 + $0x4] sm:$0xf]
    %v152 = vld [vmem:[#allocation3 + $0x8] sm:$0xf]
    %v153 = vld [vmem:[#allocation3 + $0xc] sm:$0xf]
    %v154 = vld [vmem:[%s1] sm:$0xf]
    %v155 = vld [vmem:[%s1 + $0x4] sm:$0xf]
    %v156 = vld [vmem:[%s1 + $0x8] sm:$0xf]
    %v157 = vld [vmem:[%s1 + $0xc] sm:$0xf]
    %v158 = vld [vmem:[%s1 + $0x10] sm:$0x3]
    %v163 = vunpack.c.l.b16 %v150
    %v164 = vunpack.c.l.b16 %v151
    %v165 = vunpack.c.l.b16 %v152
    %v166 = vunpack.c.l.b16 %v153
    %v167 = vpack.c.b16 %v164, %v163
    %v168 = vpack.c.b16 %v166, %v165
    %v174 = vunpack.c.l.b16 %v154
    %v175 = vunpack.c.l.b16 %v155
    %v176 = vunpack.c.l.b16 %v156
    %v177 = vunpack.c.l.b16 %v157
    %v178 = vunpack.c.l.b16 %v158
    %v179 = vpack.c.b16 %v175, %v174
    %v180 = vpack.c.b16 %v177, %v176
    %v181 = vpack.c.b16 %v178, %v178
    %vm184 = vcmask 285696
    %v186 = vsel %vm184, %v167, 0
    %v189 = vsel %vm184, %v168, 0
    %vm191 = vcmask 1040384
    %vm192 = vcmask 1041408
    %v193 = vsel %vm191, 4294967295, 65535
    %v194 = vsel %vm192, %v193, 0
    %v196 = vand.u32 %v181, %v194
    %198 = vmatprep.subr.bf16.mxu0 0
    %199 = vmatpush1.bf16.msra.mxu0 %v179
    %200 = vmatprep.subr.bf16.mxu0 0
    %201 = vmatpush1.bf16.msra.mxu0 %v180
    %202 = vmatprep.subr.bf16.mxu0 0
    %203 = vmatpush1.bf16.msra.mxu0 %v196
    %204 = vmatprep.subr.bf16.mxu0 0
    %205 = vmatpush1.bf16.msra.mxu0 0
    %206 = vmatprep.subr.bf16.mxu0 0
    %207 = vmatpush1.bf16.msra.mxu0 0
    %208 = vmatprep.subr.bf16.mxu0 0
    %209 = vmatpush1.bf16.msra.mxu0 0
    %210 = vmatprep.subr.bf16.mxu0 0
    %211 = vmatpush1.bf16.msra.mxu0 0
    %212 = vmatprep.subr.bf16.mxu0 0
    %213 = vmatpush1.bf16.msra.mxu0 0
    %214 = vmatprep.subr.bf16.mxu0 0
    %215 = vmatpush1.bf16.msra.mxu0 0
    %216 = vmatprep.subr.bf16.mxu0 0
    %217 = vmatpush1.bf16.msra.mxu0 0
    %218 = vmatprep.subr.bf16.mxu0 0
    %219 = vmatpush1.bf16.msra.mxu0 0
    %220 = vmatprep.subr.bf16.mxu0 0
    %221 = vmatpush1.bf16.msra.mxu0 0
    %222 = vmatprep.subr.bf16.mxu0 0
    %223 = vmatpush1.bf16.msra.mxu0 0
    %224 = vmatprep.subr.bf16.mxu0 0
    %225 = vmatpush1.bf16.msra.mxu0 0
    %226 = vmatprep.subr.bf16.mxu0 0
    %227 = vmatpush1.bf16.msra.mxu0 0
    %228 = vmatprep.subr.bf16.mxu0 0
    %229 = vmatpush1.bf16.msra.mxu0 0
    %230 = vmatprep.mubr.bf16.mxu0 0
    %231 = vmatmul.mubr.bf16.gmra.mrb[0].mxu0 %v186
    %v232 = vpop.f32.mrb[0].mxu0
    %v233 = vadd.f32 0.0, %v232
    %v234 = vpop.f32.mrb[0].mxu0
    %v235 = vpop.f32.mrb[0].mxu0
    %v236 = vadd.f32 0.0, %v235
    %v237 = vpop.f32.mrb[0].mxu0
    %238 = vmatprep.mubr.bf16.mxu0 0
    %239 = vmatmul.mubr.bf16.gmra.mrb[0].mxu0 %v189
    %v240 = vpop.f32.mrb[0].mxu0
    %v241 = vadd.f32 0.0, %v240
    %v242 = vpop.f32.mrb[0].mxu0
    %v243 = vpop.f32.mrb[0].mxu0
    %v244 = vadd.f32 0.0, %v243
    %v245 = vpop.f32.mrb[0].mxu0
    %246 = vdwg.mxu0
    %v247 = vld [vmem:[#allocation6] sm:$0x1]
    %v249 = vlaneseq
    %v250 = vshrl.u32 %v249, 7
    %v251 = vsub.s32 0, %v250
    %v252 = vrot.slane %v247, %v251
    %v254 = vmul.f32 %v233, %v252
    %v255 = vmul.f32 %v236, %v252
    %v256 = vmul.f32 %v241, %v252
    %v257 = vmul.f32 %v244, %v252
    %v258 = vld [vmem:[#allocation8] sm:$0x1]
    %v260 = vlaneseq
    %v261 = vshrl.u32 %v260, 7
    %v262 = vsub.s32 0, %v261
    %v263 = vrot.slane %v258, %v262
    %v265 = vadd.f32 %v254, %v263
    %v266 = vadd.f32 %v255, %v263
    %v267 = vadd.f32 %v256, %v263
    %v268 = vadd.f32 %v257, %v263
    %v269 = vmax.f32 %v265, 0.0
    %v270 = vmax.f32 %v266, 0.0
    %v271 = vmax.f32 %v267, 0.0
    %v272 = vmax.f32 %v268, 0.0
    %v273 = vpack.c.bf16 %v270, %v269
    %v274 = vpack.c.bf16 %v272, %v271
    %v275 = vld [vmem:[#allocation9] sm:$0xff]
    %v276 = vld [vmem:[#allocation9 + $0x8] sm:$0xff]
    %v277 = vld [vmem:[#allocation9 + $0x10] sm:$0xff]
    %v278 = vld [vmem:[#allocation9 + $0x18] sm:$0xff]
    %v279 = vld [vmem:[#allocation11] sm:$0x3]
    %v281 = vlaneseq
    %v282 = vshrl.u32 %v281, 7
    %v283 = vsub.s32 0, %v282
    %v284 = vrot.slane %v279, %v283
    %v285 = vlaneseq
    %v286 = vshrl.u32 %v285, 7
    %v287 = vsub.s32 1, %v286
    %v288 = vrot.slane %v279, %v287
    %v295 = vunpack.c.l.b16 %v275
    %v296 = vunpack.c.h.b16 %v275
    %v297 = vunpack.c.l.b16 %v276
    %v298 = vunpack.c.h.b16 %v276
    %v299 = vunpack.c.l.b16 %v277
    %v300 = vunpack.c.h.b16 %v277
    %v301 = vunpack.c.l.b16 %v278
    %v302 = vunpack.c.h.b16 %v278
    %v303 = vpack.c.b16 %v297, %v295
    %v304 = vpack.c.b16 %v298, %v296
    %v305 = vpack.c.b16 %v301, %v299
    %v306 = vpack.c.b16 %v302, %v300
    %vm311 = vcmask 261120
    %v313 = vsel %vm311, %v273, 0
    %v316 = vsel %vm311, %v274, 0
    %318 = vmatprep.subr.bf16.mxu0 %v304
    %319 = vmatpush1.bf16.msra.mxu0 %v303
    %320 = vmatprep.subr.bf16.mxu0 %v306
    %321 = vmatpush1.bf16.msra.mxu0 %v305
    %322 = vmatprep.subr.bf16.mxu0 0
    %323 = vmatpush1.bf16.msra.mxu0 0
    %324 = vmatprep.subr.bf16.mxu0 0
    %325 = vmatpush1.bf16.msra.mxu0 0
    %326 = vmatprep.subr.bf16.mxu0 0
    %327 = vmatpush1.bf16.msra.mxu0 0
    %328 = vmatprep.subr.bf16.mxu0 0
    %329 = vmatpush1.bf16.msra.mxu0 0
    %330 = vmatprep.subr.bf16.mxu0 0
    %331 = vmatpush1.bf16.msra.mxu0 0
    %332 = vmatprep.subr.bf16.mxu0 0
    %333 = vmatpush1.bf16.msra.mxu0 0
    %334 = vmatprep.subr.bf16.mxu0 0
    %335 = vmatpush1.bf16.msra.mxu0 0
    %336 = vmatprep.subr.bf16.mxu0 0
    %337 = vmatpush1.bf16.msra.mxu0 0
    %338 = vmatprep.subr.bf16.mxu0 0
    %339 = vmatpush1.bf16.msra.mxu0 0
    %340 = vmatprep.subr.bf16.mxu0 0
    %341 = vmatpush1.bf16.msra.mxu0 0
    %342 = vmatprep.subr.bf16.mxu0 0
    %343 = vmatpush1.bf16.msra.mxu0 0
    %344 = vmatprep.subr.bf16.mxu0 0
    %345 = vmatpush1.bf16.msra.mxu0 0
    %346 = vmatprep.subr.bf16.mxu0 0
    %347 = vmatpush1.bf16.msra.mxu0 0
    %348 = vmatprep.subr.bf16.mxu0 0
    %349 = vmatpush1.bf16.msra.mxu0 0
    %350 = vmatprep.mubr.bf16.mxu0 0
    %351 = vmatmul.mubr.bf16.gmra.mrb[0].mxu0 %v313
    %v352 = vpop.f32.mrb[0].mxu0
    %v353 = vadd.f32 %v284, %v352
    %v354 = vpop.f32.mrb[0].mxu0
    %v355 = vadd.f32 %v288, %v354
    %v356 = vpop.f32.mrb[0].mxu0
    %v357 = vadd.f32 %v284, %v356
    %v358 = vpop.f32.mrb[0].mxu0
    %v359 = vadd.f32 %v288, %v358
    %360 = vmatprep.mubr.bf16.mxu0 0
    %361 = vmatmul.mubr.bf16.gmra.mrb[0].mxu0 %v316
    %v362 = vpop.f32.mrb[0].mxu0
    %v363 = vadd.f32 %v284, %v362
    %v364 = vpop.f32.mrb[0].mxu0
    %v365 = vadd.f32 %v288, %v364
    %v366 = vpop.f32.mrb[0].mxu0
    %v367 = vadd.f32 %v284, %v366
    %v368 = vpop.f32.mrb[0].mxu0
    %v369 = vadd.f32 %v288, %v368
    %370 = vdwg.mxu0
    %371 = vst [vmem:[#allocation2] sm:$0xff] %v353
    %372 = vst [vmem:[#allocation2 + $0x8] sm:$0xff] %v355
    %373 = vst [vmem:[#allocation2 + $0x10] sm:$0xff] %v357
    %374 = vst [vmem:[#allocation2 + $0x18] sm:$0xff] %v359
    %375 = vst [vmem:[#allocation2 + $0x20] sm:$0xff] %v363
    %376 = vst [vmem:[#allocation2 + $0x28] sm:$0xff] %v365
    %377 = vst [vmem:[#allocation2 + $0x30] sm:$0xff] %v367
    %378 = vst [vmem:[#allocation2 + $0x38] sm:$0xff] %v369
    %v379 = vpack.c.bf16 %v272, %v272
    %v380 = vld [vmem:[#allocation12] sm:$0xff]
    %v381 = vld [vmem:[#allocation12 + $0x8] sm:$0xff]
    %v382 = vld [vmem:[#allocation12 + $0x10] sm:$0xff]
    %v383 = vld [vmem:[#allocation12 + $0x18] sm:$0xff]
    %v384 = vld [vmem:[#allocation14] sm:$0x3]
    %v386 = vlaneseq
    %v387 = vshrl.u32 %v386, 7
    %v388 = vsub.s32 0, %v387
    %v389 = vrot.slane %v384, %v388
    %v390 = vlaneseq
    %v391 = vshrl.u32 %v390, 7
    %v392 = vsub.s32 1, %v391
    %v393 = vrot.slane %v384, %v392
    %v397 = vrot.slane %v379, 3
    %v402 = vunpack.c.l.b16 %v380
    %v403 = vunpack.c.h.b16 %v380
    %v404 = vunpack.c.l.b16 %v381
    %v405 = vunpack.c.h.b16 %v381
    %v406 = vunpack.c.l.b16 %v382
    %v407 = vunpack.c.h.b16 %v382
    %v408 = vunpack.c.l.b16 %v383
    %v409 = vunpack.c.h.b16 %v383
    %v410 = vpack.c.b16 %v404, %v402
    %v411 = vpack.c.b16 %v405, %v403
    %v412 = vpack.c.b16 %v408, %v406
    %v413 = vpack.c.b16 %v409, %v407
    %v419 = vsel %vm311, %v397, 0
    %421 = vmatprep.subr.bf16.mxu0 %v411
    %422 = vmatpush1.bf16.msra.mxu0 %v410
    %423 = vmatprep.subr.bf16.mxu0 %v413
    %424 = vmatpush1.bf16.msra.mxu0 %v412
    %425 = vmatprep.subr.bf16.mxu0 0
    %426 = vmatpush1.bf16.msra.mxu0 0
    %427 = vmatprep.subr.bf16.mxu0 0
    %428 = vmatpush1.bf16.msra.mxu0 0
    %429 = vmatprep.subr.bf16.mxu0 0
    %430 = vmatpush1.bf16.msra.mxu0 0
    %431 = vmatprep.subr.bf16.mxu0 0
    %432 = vmatpush1.bf16.msra.mxu0 0
    %433 = vmatprep.subr.bf16.mxu0 0
    %434 = vmatpush1.bf16.msra.mxu0 0
    %435 = vmatprep.subr.bf16.mxu0 0
    %436 = vmatpush1.bf16.msra.mxu0 0
    %437 = vmatprep.subr.bf16.mxu0 0
    %438 = vmatpush1.bf16.msra.mxu0 0
    %439 = vmatprep.subr.bf16.mxu0 0
    %440 = vmatpush1.bf16.msra.mxu0 0
    %441 = vmatprep.subr.bf16.mxu0 0
    %442 = vmatpush1.bf16.msra.mxu0 0
    %443 = vmatprep.subr.bf16.mxu0 0
    %444 = vmatpush1.bf16.msra.mxu0 0
    %445 = vmatprep.subr.bf16.mxu0 0
    %446 = vmatpush1.bf16.msra.mxu0 0
    %447 = vmatprep.subr.bf16.mxu0 0
    %448 = vmatpush1.bf16.msra.mxu0 0
    %449 = vmatprep.subr.bf16.mxu0 0
    %450 = vmatpush1.bf16.msra.mxu0 0
    %451 = vmatprep.subr.bf16.mxu0 0
    %452 = vmatpush1.bf16.msra.mxu0 0
    %453 = vmatprep.mubr.bf16.mxu0 0
    %454 = vmatmul.mubr.bf16.gmra.mrb[0].mxu0 %v419
    %v455 = vpop.f32.mrb[0].mxu0
    %v456 = vadd.f32 %v389, %v455
    %v457 = vpop.f32.mrb[0].mxu0
    %v458 = vadd.f32 %v393, %v457
    %v459 = vpop.f32.mrb[0].mxu0
    %v460 = vpop.f32.mrb[0].mxu0
    %461 = vdwg.mxu0
    %v462 = vld [vmem:[%s8] sm:$0xff]
    %v463 = vld [vmem:[%s8 + $0x8] sm:$0xff]
    %v464 = vld [vmem:[%s8 + $0x10] sm:$0xff]
    %v465 = vld [vmem:[%s8 + $0x18] sm:$0xff]
    %v466 = vld [vmem:[%s8 + $0x20] sm:$0xff]
    %v467 = vld [vmem:[%s8 + $0x28] sm:$0xff]
    %v468 = vld [vmem:[%s8 + $0x30] sm:$0xff]
    %v469 = vld [vmem:[%s8 + $0x38] sm:$0xff]
    %v470 = vld [vmem:[#allocation2] sm:$0x3]
    %v471 = vld [vmem:[#allocation2 + $0x8] sm:$0x3]
    %v480 = vunpack.c.l.b16 %v462
    %v481 = vunpack.c.h.b16 %v462
    %v482 = vunpack.c.l.b16 %v463
    %v483 = vunpack.c.h.b16 %v463
    %v484 = vunpack.c.l.b16 %v464
    %v485 = vunpack.c.h.b16 %v464
    %v486 = vunpack.c.l.b16 %v465
    %v487 = vunpack.c.h.b16 %v465
    %v488 = vunpack.c.l.b16 %v466
    %v489 = vunpack.c.h.b16 %v466
    %v490 = vunpack.c.l.b16 %v467
    %v491 = vunpack.c.h.b16 %v467
    %v492 = vunpack.c.l.b16 %v468
    %v493 = vunpack.c.h.b16 %v468
    %v494 = vunpack.c.l.b16 %v469
    %v495 = vunpack.c.h.b16 %v469
    %v496 = vpack.c.b16 %v482, %v480
    %v497 = vpack.c.b16 %v483, %v481
    %v498 = vpack.c.b16 %v486, %v484
    %v499 = vpack.c.b16 %v487, %v485
    %v500 = vpack.c.b16 %v490, %v488
    %v501 = vpack.c.b16 %v491, %v489
    %v502 = vpack.c.b16 %v494, %v492
    %v503 = vpack.c.b16 %v495, %v493
    %vm512 = vcmask 523264
    %v514 = vsel %vm512, 0, 0
    %516 = vmatprep.subr.bf16.mxu0 %v497
    %517 = vmatpush1.bf16.msra.mxu0 %v496
    %518 = vmatprep.subr.bf16.mxu0 %v499
    %519 = vmatpush1.bf16.msra.mxu0 %v498
    %520 = vmatprep.subr.bf16.mxu0 %v501
    %521 = vmatpush1.bf16.msra.mxu0 %v500
    %522 = vmatprep.subr.bf16.mxu0 %v503
    %523 = vmatpush1.bf16.msra.mxu0 %v502
    %524 = vmatprep.subr.bf16.mxu0 0
    %525 = vmatpush1.bf16.msra.mxu0 0
    %526 = vmatprep.subr.bf16.mxu0 0
    %527 = vmatpush1.bf16.msra.mxu0 0
    %528 = vmatprep.subr.bf16.mxu0 0
    %529 = vmatpush1.bf16.msra.mxu0 0
    %530 = vmatprep.subr.bf16.mxu0 0
    %531 = vmatpush1.bf16.msra.mxu0 0
    %532 = vmatprep.subr.bf16.mxu0 0
    %533 = vmatpush1.bf16.msra.mxu0 0
    %534 = vmatprep.subr.bf16.mxu0 0
    %535 = vmatpush1.bf16.msra.mxu0 0
    %536 = vmatprep.subr.bf16.mxu0 0
    %537 = vmatpush1.bf16.msra.mxu0 0
    %538 = vmatprep.subr.bf16.mxu0 0
    %539 = vmatpush1.bf16.msra.mxu0 0
    %540 = vmatprep.subr.bf16.mxu0 0
    %541 = vmatpush1.bf16.msra.mxu0 0
    %542 = vmatprep.subr.bf16.mxu0 0
    %543 = vmatpush1.bf16.msra.mxu0 0
    %544 = vmatprep.subr.bf16.mxu0 0
    %545 = vmatpush1.bf16.msra.mxu0 0
    %546 = vmatprep.subr.bf16.mxu0 0
    %547 = vmatpush1.bf16.msra.mxu0 0
    %548 = vmatprep.mubr.bf16.mxu0 0
    %549 = vmatmul.mubr.bf16.gmra.mrb[0].mxu0 %v514
    %v550 = vpop.f32.mrb[0].mxu0
    %v551 = vadd.f32 0.0, %v550
    %v552 = vpop.f32.mrb[0].mxu0
    %v553 = vadd.f32 0.0, %v552
    %v554 = vpop.f32.mrb[0].mxu0
    %v555 = vpop.f32.mrb[0].mxu0
    %556 = vdwg.mxu0
    %v557 = vadd.f32 %v470, %v551
    %v558 = vadd.f32 %v471, %v553
    %v559 = vtanh.pop %v557
    %v560 = vtanh.pop %v558
    %v561 = vmul.f32 %v559, 0.5
    %v562 = vmul.f32 %v560, 0.5
    %v563 = vadd.f32 %v561, 0.5
    %v564 = vadd.f32 %v562, 0.5
    %v565 = vmul.f32 %v563, 0.0
    %567 = vrot.lane.b32.xlu0 %v560, 64
    %v568 = vpop.permute.xlu0 %567
    %v570 = vmul.f32 %v563, %v568
    %572 = vrot.lane.b32.xlu0 %v570, 64
    %v573 = vpop.permute.xlu0 %572
    %v575 = vadd.f32 %v565, %v573
    %v576 = vtanh.pop %v575
    %578 = vrot.lane.b32.xlu0 %v576, 64
    %v579 = vpop.permute.xlu0 %578
    %v581 = vmul.f32 %v564, %v579
    %v582 = vld [vmem:[#allocation2] sm:$0xc]
    %v583 = vld [vmem:[#allocation2 + $0x8] sm:$0xc]
    %v584 = vpack.c.bf16 %v581, %v581
    %v586 = vsel %vm512, %v584, 0
    %588 = vmatprep.subr.bf16.mxu0 %v497
    %589 = vmatpush1.bf16.msra.mxu0 %v496
    %590 = vmatprep.subr.bf16.mxu0 %v499
    %591 = vmatpush1.bf16.msra.mxu0 %v498
    %592 = vmatprep.subr.bf16.mxu0 %v501
    %593 = vmatpush1.bf16.msra.mxu0 %v500
    %594 = vmatprep.subr.bf16.mxu0 %v503
    %595 = vmatpush1.bf16.msra.mxu0 %v502
    %596 = vmatprep.subr.bf16.mxu0 0
    %597 = vmatpush1.bf16.msra.mxu0 0
    %598 = vmatprep.subr.bf16.mxu0 0
    %599 = vmatpush1.bf16.msra.mxu0 0
    %600 = vmatprep.subr.bf16.mxu0 0
    %601 = vmatpush1.bf16.msra.mxu0 0
    %602 = vmatprep.subr.bf16.mxu0 0
    %603 = vmatpush1.bf16.msra.mxu0 0
    %604 = vmatprep.subr.bf16.mxu0 0
    %605 = vmatpush1.bf16.msra.mxu0 0
    %606 = vmatprep.subr.bf16.mxu0 0
    %607 = vmatpush1.bf16.msra.mxu0 0
    %608 = vmatprep.subr.bf16.mxu0 0
    %609 = vmatpush1.bf16.msra.mxu0 0
    %610 = vmatprep.subr.bf16.mxu0 0
    %611 = vmatpush1.bf16.msra.mxu0 0
    %612 = vmatprep.subr.bf16.mxu0 0
    %613 = vmatpush1.bf16.msra.mxu0 0
    %614 = vmatprep.subr.bf16.mxu0 0
    %615 = vmatpush1.bf16.msra.mxu0 0
    %616 = vmatprep.subr.bf16.mxu0 0
    %617 = vmatpush1.bf16.msra.mxu0 0
    %618 = vmatprep.subr.bf16.mxu0 0
    %619 = vmatpush1.bf16.msra.mxu0 0
    %620 = vmatprep.mubr.bf16.mxu0 0
    %621 = vmatmul.mubr.bf16.gmra.mrb[0].mxu0 %v586
    %v622 = vpop.f32.mrb[0].mxu0
    %v623 = vadd.f32 0.0, %v622
    %v624 = vpop.f32.mrb[0].mxu0
    %v625 = vadd.f32 0.0, %v624
    %v626 = vpop.f32.mrb[0].mxu0
    %v627 = vpop.f32.mrb[0].mxu0
    %628 = vdwg.mxu0
    %v631 = vrot.slane %v623, 6
    %v632 = vrot.slane %v625, 6
    %v635 = vadd.f32 %v582, %v631
    %v636 = vadd.f32 %v583, %v632
    %v637 = vtanh.pop %v635
    %v638 = vtanh.pop %v636
    %v639 = vmul.f32 %v637, 0.5
    %v640 = vmul.f32 %v638, 0.5
    %v641 = vadd.f32 %v639, 0.5
    %v642 = vadd.f32 %v640, 0.5
    %v644 = vrot.slane %v575, 6
    %v646 = vmul.f32 %v641, %v644
    %648 = vrot.lane.b32.xlu0 %v638, 64
    %v649 = vpop.permute.xlu0 %648
    %v651 = vmul.f32 %v641, %v649
    %653 = vrot.lane.b32.xlu0 %v651, 64
    %v654 = vpop.permute.xlu0 %653
    %v656 = vadd.f32 %v646, %v654
    %v657 = vtanh.pop %v656
    %659 = vrot.lane.b32.xlu0 %v657, 64
    %v660 = vpop.permute.xlu0 %659
    %v662 = vmul.f32 %v642, %v660
    %v663 = vld [vmem:[#allocation2] sm:$0x30]
    %v664 = vld [vmem:[#allocation2 + $0x8] sm:$0x30]
    %v665 = vpack.c.bf16 %v662, %v662
    %v667 = vrot.slane %v665, 1
    %v669 = vsel %vm512, %v667, 0
    %671 = vmatprep.subr.bf16.mxu0 %v497
    %672 = vmatpush1.bf16.msra.mxu0 %v496
    %673 = vmatprep.subr.bf16.mxu0 %v499
    %674 = vmatpush1.bf16.msra.mxu0 %v498
    %675 = vmatprep.subr.bf16.mxu0 %v501
    %676 = vmatpush1.bf16.msra.mxu0 %v500
    %677 = vmatprep.subr.bf16.mxu0 %v503
    %678 = vmatpush1.bf16.msra.mxu0 %v502
    %679 = vmatprep.subr.bf16.mxu0 0
    %680 = vmatpush1.bf16.msra.mxu0 0
    %681 = vmatprep.subr.bf16.mxu0 0
    %682 = vmatpush1.bf16.msra.mxu0 0
    %683 = vmatprep.subr.bf16.mxu0 0
    %684 = vmatpush1.bf16.msra.mxu0 0
    %685 = vmatprep.subr.bf16.mxu0 0
    %686 = vmatpush1.bf16.msra.mxu0 0
    %687 = vmatprep.subr.bf16.mxu0 0
    %688 = vmatpush1.bf16.msra.mxu0 0
    %689 = vmatprep.subr.bf16.mxu0 0
    %690 = vmatpush1.bf16.msra.mxu0 0
    %691 = vmatprep.subr.bf16.mxu0 0
    %692 = vmatpush1.bf16.msra.mxu0 0
    %693 = vmatprep.subr.bf16.mxu0 0
    %694 = vmatpush1.bf16.msra.mxu0 0
    %695 = vmatprep.subr.bf16.mxu0 0
    %696 = vmatpush1.bf16.msra.mxu0 0
    %697 = vmatprep.subr.bf16.mxu0 0
    %698 = vmatpush1.bf16.msra.mxu0 0
    %699 = vmatprep.subr.bf16.mxu0 0
    %700 = vmatpush1.bf16.msra.mxu0 0
    %701 = vmatprep.subr.bf16.mxu0 0
    %702 = vmatpush1.bf16.msra.mxu0 0
    %703 = vmatprep.mubr.bf16.mxu0 0
    %704 = vmatmul.mubr.bf16.gmra.mrb[0].mxu0 %v669
    %v705 = vpop.f32.mrb[0].mxu0
    %v706 = vadd.f32 0.0, %v705
    %v707 = vpop.f32.mrb[0].mxu0
    %v708 = vadd.f32 0.0, %v707
    %v709 = vpop.f32.mrb[0].mxu0
    %v710 = vpop.f32.mrb[0].mxu0
    %711 = vdwg.mxu0
    %v714 = vrot.slane %v706, 4
    %v715 = vrot.slane %v708, 4
    %v718 = vadd.f32 %v663, %v714
    %v719 = vadd.f32 %v664, %v715
    %v720 = vtanh.pop %v718
    %v721 = vtanh.pop %v719
    %v722 = vmul.f32 %v720, 0.5
    %v723 = vmul.f32 %v721, 0.5
    %v724 = vadd.f32 %v722, 0.5
    %v725 = vadd.f32 %v723, 0.5
    %v727 = vrot.slane %v656, 6
    %v729 = vmul.f32 %v724, %v727
    %731 = vrot.lane.b32.xlu0 %v721, 64
    %v732 = vpop.permute.xlu0 %731
    %v734 = vmul.f32 %v724, %v732
    %736 = vrot.lane.b32.xlu0 %v734, 64
    %v737 = vpop.permute.xlu0 %736
    %v739 = vadd.f32 %v729, %v737
    %v740 = vtanh.pop %v739
    %742 = vrot.lane.b32.xlu0 %v740, 64
    %v743 = vpop.permute.xlu0 %742
    %v745 = vmul.f32 %v725, %v743
    %v746 = vld [vmem:[#allocation2] sm:$0xc0]
    %v747 = vld [vmem:[#allocation2 + $0x8] sm:$0xc0]
    %v748 = vpack.c.bf16 %v745, %v745
    %v750 = vrot.slane %v748, 2
    %v752 = vsel %vm512, %v750, 0
    %754 = vmatprep.subr.bf16.mxu0 %v497
    %755 = vmatpush1.bf16.msra.mxu0 %v496
    %756 = vmatprep.subr.bf16.mxu0 %v499
    %757 = vmatpush1.bf16.msra.mxu0 %v498
    %758 = vmatprep.subr.bf16.mxu0 %v501
    %759 = vmatpush1.bf16.msra.mxu0 %v500
    %760 = vmatprep.subr.bf16.mxu0 %v503
    %761 = vmatpush1.bf16.msra.mxu0 %v502
    %762 = vmatprep.subr.bf16.mxu0 0
    %763 = vmatpush1.bf16.msra.mxu0 0
    %764 = vmatprep.subr.bf16.mxu0 0
    %765 = vmatpush1.bf16.msra.mxu0 0
    %766 = vmatprep.subr.bf16.mxu0 0
    %767 = vmatpush1.bf16.msra.mxu0 0
    %768 = vmatprep.subr.bf16.mxu0 0
    %769 = vmatpush1.bf16.msra.mxu0 0
    %770 = vmatprep.subr.bf16.mxu0 0
    %771 = vmatpush1.bf16.msra.mxu0 0
    %772 = vmatprep.subr.bf16.mxu0 0
    %773 = vmatpush1.bf16.msra.mxu0 0
    %774 = vmatprep.subr.bf16.mxu0 0
    %775 = vmatpush1.bf16.msra.mxu0 0
    %776 = vmatprep.subr.bf16.mxu0 0
    %777 = vmatpush1.bf16.msra.mxu0 0
    %778 = vmatprep.subr.bf16.mxu0 0
    %779 = vmatpush1.bf16.msra.mxu0 0
    %780 = vmatprep.subr.bf16.mxu0 0
    %781 = vmatpush1.bf16.msra.mxu0 0
    %782 = vmatprep.subr.bf16.mxu0 0
    %783 = vmatpush1.bf16.msra.mxu0 0
    %784 = vmatprep.subr.bf16.mxu0 0
    %785 = vmatpush1.bf16.msra.mxu0 0
    %786 = vmatprep.mubr.bf16.mxu0 0
    %787 = vmatmul.mubr.bf16.gmra.mrb[0].mxu0 %v752
    %v788 = vpop.f32.mrb[0].mxu0
    %v789 = vadd.f32 0.0, %v788
    %v790 = vpop.f32.mrb[0].mxu0
    %v791 = vadd.f32 0.0, %v790
    %v792 = vpop.f32.mrb[0].mxu0
    %v793 = vpop.f32.mrb[0].mxu0
    %794 = vdwg.mxu0
    %v797 = vrot.slane %v789, 2
    %v798 = vrot.slane %v791, 2
    %v801 = vadd.f32 %v746, %v797
    %v802 = vadd.f32 %v747, %v798
    %v803 = vtanh.pop %v801
    %v804 = vtanh.pop %v802
    %v805 = vmul.f32 %v803, 0.5
    %v806 = vmul.f32 %v804, 0.5
    %v807 = vadd.f32 %v805, 0.5
    %v808 = vadd.f32 %v806, 0.5
    %v810 = vrot.slane %v739, 6
    %v812 = vmul.f32 %v807, %v810
    %814 = vrot.lane.b32.xlu0 %v804, 64
    %v815 = vpop.permute.xlu0 %814
    %v817 = vmul.f32 %v807, %v815
    %819 = vrot.lane.b32.xlu0 %v817, 64
    %v820 = vpop.permute.xlu0 %819
    %v822 = vadd.f32 %v812, %v820
    %v823 = vtanh.pop %v822
    %825 = vrot.lane.b32.xlu0 %v823, 64
    %v826 = vpop.permute.xlu0 %825
    %v828 = vmul.f32 %v808, %v826
    %v829 = vld [vmem:[#allocation2 + $0x10] sm:$0x3]
    %v830 = vld [vmem:[#allocation2 + $0x18] sm:$0x3]
    %v831 = vpack.c.bf16 %v828, %v828
    %v833 = vrot.slane %v831, 3
    %v835 = vsel %vm512, %v833, 0
    %837 = vmatprep.subr.bf16.mxu0 %v497
    %838 = vmatpush1.bf16.msra.mxu0 %v496
    %839 = vmatprep.subr.bf16.mxu0 %v499
    %840 = vmatpush1.bf16.msra.mxu0 %v498
    %841 = vmatprep.subr.bf16.mxu0 %v501
    %842 = vmatpush1.bf16.msra.mxu0 %v500
    %843 = vmatprep.subr.bf16.mxu0 %v503
    %844 = vmatpush1.bf16.msra.mxu0 %v502
    %845 = vmatprep.subr.bf16.mxu0 0
    %846 = vmatpush1.bf16.msra.mxu0 0
    %847 = vmatprep.subr.bf16.mxu0 0
    %848 = vmatpush1.bf16.msra.mxu0 0
    %849 = vmatprep.subr.bf16.mxu0 0
    %850 = vmatpush1.bf16.msra.mxu0 0
    %851 = vmatprep.subr.bf16.mxu0 0
    %852 = vmatpush1.bf16.msra.mxu0 0
    %853 = vmatprep.subr.bf16.mxu0 0
    %854 = vmatpush1.bf16.msra.mxu0 0
    %855 = vmatprep.subr.bf16.mxu0 0
    %856 = vmatpush1.bf16.msra.mxu0 0
    %857 = vmatprep.subr.bf16.mxu0 0
    %858 = vmatpush1.bf16.msra.mxu0 0
    %859 = vmatprep.subr.bf16.mxu0 0
    %860 = vmatpush1.bf16.msra.mxu0 0
    %861 = vmatprep.subr.bf16.mxu0 0
    %862 = vmatpush1.bf16.msra.mxu0 0
    %863 = vmatprep.subr.bf16.mxu0 0
    %864 = vmatpush1.bf16.msra.mxu0 0
    %865 = vmatprep.subr.bf16.mxu0 0
    %866 = vmatpush1.bf16.msra.mxu0 0
    %867 = vmatprep.subr.bf16.mxu0 0
    %868 = vmatpush1.bf16.msra.mxu0 0
    %869 = vmatprep.mubr.bf16.mxu0 0
    %870 = vmatmul.mubr.bf16.gmra.mrb[0].mxu0 %v835
    %v871 = vpop.f32.mrb[0].mxu0
    %v872 = vadd.f32 0.0, %v871
    %v873 = vpop.f32.mrb[0].mxu0
    %v874 = vadd.f32 0.0, %v873
    %v875 = vpop.f32.mrb[0].mxu0
    %v876 = vpop.f32.mrb[0].mxu0
    %877 = vdwg.mxu0
    %v878 = vadd.f32 %v829, %v872
    %v879 = vadd.f32 %v830, %v874
    %v880 = vtanh.pop %v878
    %v881 = vtanh.pop %v879
    %v882 = vmul.f32 %v880, 0.5
    %v883 = vmul.f32 %v881, 0.5
    %v884 = vadd.f32 %v882, 0.5
    %v885 = vadd.f32 %v883, 0.5
    %v887 = vrot.slane %v822, 6
    %v889 = vmul.f32 %v884, %v887
    %891 = vrot.lane.b32.xlu0 %v881, 64
    %v892 = vpop.permute.xlu0 %891
    %v894 = vmul.f32 %v884, %v892
    %896 = vrot.lane.b32.xlu0 %v894, 64
    %v897 = vpop.permute.xlu0 %896
    %v899 = vadd.f32 %v889, %v897
    %v900 = vtanh.pop %v899
    %902 = vrot.lane.b32.xlu0 %v900, 64
    %v903 = vpop.permute.xlu0 %902
    %v905 = vmul.f32 %v885, %v903
    %v906 = vld [vmem:[#allocation2 + $0x10] sm:$0xc]
    %v907 = vld [vmem:[#allocation2 + $0x18] sm:$0xc]
    %v908 = vpack.c.bf16 %v905, %v905
    %v910 = vsel %vm512, %v908, 0
    %912 = vmatprep.subr.bf16.mxu0 %v497
    %913 = vmatpush1.bf16.msra.mxu0 %v496
    %914 = vmatprep.subr.bf16.mxu0 %v499
    %915 = vmatpush1.bf16.msra.mxu0 %v498
    %916 = vmatprep.subr.bf16.mxu0 %v501
    %917 = vmatpush1.bf16.msra.mxu0 %v500
    %918 = vmatprep.subr.bf16.mxu0 %v503
    %919 = vmatpush1.bf16.msra.mxu0 %v502
    %920 = vmatprep.subr.bf16.mxu0 0
    %921 = vmatpush1.bf16.msra.mxu0 0
    %922 = vmatprep.subr.bf16.mxu0 0
    %923 = vmatpush1.bf16.msra.mxu0 0
    %924 = vmatprep.subr.bf16.mxu0 0
    %925 = vmatpush1.bf16.msra.mxu0 0
    %926 = vmatprep.subr.bf16.mxu0 0
    %927 = vmatpush1.bf16.msra.mxu0 0
    %928 = vmatprep.subr.bf16.mxu0 0
    %929 = vmatpush1.bf16.msra.mxu0 0
    %930 = vmatprep.subr.bf16.mxu0 0
    %931 = vmatpush1.bf16.msra.mxu0 0
    %932 = vmatprep.subr.bf16.mxu0 0
    %933 = vmatpush1.bf16.msra.mxu0 0
    %934 = vmatprep.subr.bf16.mxu0 0
    %935 = vmatpush1.bf16.msra.mxu0 0
    %936 = vmatprep.subr.bf16.mxu0 0
    %937 = vmatpush1.bf16.msra.mxu0 0
    %938 = vmatprep.subr.bf16.mxu0 0
    %939 = vmatpush1.bf16.msra.mxu0 0
    %940 = vmatprep.subr.bf16.mxu0 0
    %941 = vmatpush1.bf16.msra.mxu0 0
    %942 = vmatprep.subr.bf16.mxu0 0
    %943 = vmatpush1.bf16.msra.mxu0 0
    %944 = vmatprep.mubr.bf16.mxu0 0
    %945 = vmatmul.mubr.bf16.gmra.mrb[0].mxu0 %v910
    %v946 = vpop.f32.mrb[0].mxu0
    %v947 = vadd.f32 0.0, %v946
    %v948 = vpop.f32.mrb[0].mxu0
    %v949 = vadd.f32 0.0, %v948
    %v950 = vpop.f32.mrb[0].mxu0
    %v951 = vpop.f32.mrb[0].mxu0
    %952 = vdwg.mxu0
    %v955 = vrot.slane %v947, 6
    %v956 = vrot.slane %v949, 6
    %v959 = vadd.f32 %v906, %v955
    %v960 = vadd.f32 %v907, %v956
    %v961 = vtanh.pop %v959
    %v962 = vtanh.pop %v960
    %v963 = vmul.f32 %v961, 0.5
    %v964 = vmul.f32 %v962, 0.5
    %v965 = vadd.f32 %v963, 0.5
    %v966 = vadd.f32 %v964, 0.5
    %v968 = vrot.slane %v899, 6
    %v970 = vmul.f32 %v965, %v968
    %972 = vrot.lane.b32.xlu0 %v962, 64
    %v973 = vpop.permute.xlu0 %972
    %v975 = vmul.f32 %v965, %v973
    %977 = vrot.lane.b32.xlu0 %v975, 64
    %v978 = vpop.permute.xlu0 %977
    %v980 = vadd.f32 %v970, %v978
    %v981 = vtanh.pop %v980
    %983 = vrot.lane.b32.xlu0 %v981, 64
    %v984 = vpop.permute.xlu0 %983
    %v986 = vmul.f32 %v966, %v984
    %v987 = vld [vmem:[#allocation2 + $0x10] sm:$0x30]
    %v988 = vld [vmem:[#allocation2 + $0x18] sm:$0x30]
    %v989 = vpack.c.bf16 %v986, %v986
    %v991 = vrot.slane %v989, 1
    %v993 = vsel %vm512, %v991, 0
    %995 = vmatprep.subr.bf16.mxu0 %v497
    %996 = vmatpush1.bf16.msra.mxu0 %v496
    %997 = vmatprep.subr.bf16.mxu0 %v499
    %998 = vmatpush1.bf16.msra.mxu0 %v498
    %999 = vmatprep.subr.bf16.mxu0 %v501
    %1000 = vmatpush1.bf16.msra.mxu0 %v500
    %1001 = vmatprep.subr.bf16.mxu0 %v503
    %1002 = vmatpush1.bf16.msra.mxu0 %v502
    %1003 = vmatprep.subr.bf16.mxu0 0
    %1004 = vmatpush1.bf16.msra.mxu0 0
    %1005 = vmatprep.subr.bf16.mxu0 0
    %1006 = vmatpush1.bf16.msra.mxu0 0
    %1007 = vmatprep.subr.bf16.mxu0 0
    %1008 = vmatpush1.bf16.msra.mxu0 0
    %1009 = vmatprep.subr.bf16.mxu0 0
    %1010 = vmatpush1.bf16.msra.mxu0 0
    %1011 = vmatprep.subr.bf16.mxu0 0
    %1012 = vmatpush1.bf16.msra.mxu0 0
    %1013 = vmatprep.subr.bf16.mxu0 0
    %1014 = vmatpush1.bf16.msra.mxu0 0
    %1015 = vmatprep.subr.bf16.mxu0 0
    %1016 = vmatpush1.bf16.msra.mxu0 0
    %1017 = vmatprep.subr.bf16.mxu0 0
    %1018 = vmatpush1.bf16.msra.mxu0 0
    %1019 = vmatprep.subr.bf16.mxu0 0
    %1020 = vmatpush1.bf16.msra.mxu0 0
    %1021 = vmatprep.subr.bf16.mxu0 0
    %1022 = vmatpush1.bf16.msra.mxu0 0
    %1023 = vmatprep.subr.bf16.mxu0 0
    %1024 = vmatpush1.bf16.msra.mxu0 0
    %1025 = vmatprep.subr.bf16.mxu0 0
    %1026 = vmatpush1.bf16.msra.mxu0 0
    %1027 = vmatprep.mubr.bf16.mxu0 0
    %1028 = vmatmul.mubr.bf16.gmra.mrb[0].mxu0 %v993
    %v1029 = vpop.f32.mrb[0].mxu0
    %v1030 = vadd.f32 0.0, %v1029
    %v1031 = vpop.f32.mrb[0].mxu0
    %v1032 = vadd.f32 0.0, %v1031
    %v1033 = vpop.f32.mrb[0].mxu0
    %v1034 = vpop.f32.mrb[0].mxu0
    %1035 = vdwg.mxu0
    %v1038 = vrot.slane %v1030, 4
    %v1039 = vrot.slane %v1032, 4
    %v1042 = vadd.f32 %v987, %v1038
    %v1043 = vadd.f32 %v988, %v1039
    %v1044 = vtanh.pop %v1042
    %v1045 = vtanh.pop %v1043
    %v1046 = vmul.f32 %v1044, 0.5
    %v1047 = vmul.f32 %v1045, 0.5
    %v1048 = vadd.f32 %v1046, 0.5
    %v1049 = vadd.f32 %v1047, 0.5
    %v1051 = vrot.slane %v980, 6
    %v1053 = vmul.f32 %v1048, %v1051
    %1055 = vrot.lane.b32.xlu0 %v1045, 64
    %v1056 = vpop.permute.xlu0 %1055
    %v1058 = vmul.f32 %v1048, %v1056
    %1060 = vrot.lane.b32.xlu0 %v1058, 64
    %v1061 = vpop.permute.xlu0 %1060
    %v1063 = vadd.f32 %v1053, %v1061
    %v1064 = vtanh.pop %v1063
    %1066 = vrot.lane.b32.xlu0 %v1064, 64
    %v1067 = vpop.permute.xlu0 %1066
    %v1069 = vmul.f32 %v1049, %v1067
    %v1070 = vld [vmem:[#allocation2 + $0x10] sm:$0xc0]
    %v1071 = vld [vmem:[#allocation2 + $0x18] sm:$0xc0]
    %v1072 = vpack.c.bf16 %v1069, %v1069
    %v1074 = vrot.slane %v1072, 2
    %v1076 = vsel %vm512, %v1074, 0
    %1078 = vmatprep.subr.bf16.mxu0 %v497
    %1079 = vmatpush1.bf16.msra.mxu0 %v496
    %1080 = vmatprep.subr.bf16.mxu0 %v499
    %1081 = vmatpush1.bf16.msra.mxu0 %v498
    %1082 = vmatprep.subr.bf16.mxu0 %v501
    %1083 = vmatpush1.bf16.msra.mxu0 %v500
    %1084 = vmatprep.subr.bf16.mxu0 %v503
    %1085 = vmatpush1.bf16.msra.mxu0 %v502
    %1086 = vmatprep.subr.bf16.mxu0 0
    %1087 = vmatpush1.bf16.msra.mxu0 0
    %1088 = vmatprep.subr.bf16.mxu0 0
    %1089 = vmatpush1.bf16.msra.mxu0 0
    %1090 = vmatprep.subr.bf16.mxu0 0
    %1091 = vmatpush1.bf16.msra.mxu0 0
    %1092 = vmatprep.subr.bf16.mxu0 0
    %1093 = vmatpush1.bf16.msra.mxu0 0
    %1094 = vmatprep.subr.bf16.mxu0 0
    %1095 = vmatpush1.bf16.msra.mxu0 0
    %1096 = vmatprep.subr.bf16.mxu0 0
    %1097 = vmatpush1.bf16.msra.mxu0 0
    %1098 = vmatprep.subr.bf16.mxu0 0
    %1099 = vmatpush1.bf16.msra.mxu0 0
    %1100 = vmatprep.subr.bf16.mxu0 0
    %1101 = vmatpush1.bf16.msra.mxu0 0
    %1102 = vmatprep.subr.bf16.mxu0 0
    %1103 = vmatpush1.bf16.msra.mxu0 0
    %1104 = vmatprep.subr.bf16.mxu0 0
    %1105 = vmatpush1.bf16.msra.mxu0 0
    %1106 = vmatprep.subr.bf16.mxu0 0
    %1107 = vmatpush1.bf16.msra.mxu0 0
    %1108 = vmatprep.subr.bf16.mxu0 0
    %1109 = vmatpush1.bf16.msra.mxu0 0
    %1110 = vmatprep.mubr.bf16.mxu0 0
    %1111 = vmatmul.mubr.bf16.gmra.mrb[0].mxu0 %v1076
    %v1112 = vpop.f32.mrb[0].mxu0
    %v1113 = vadd.f32 0.0, %v1112
    %v1114 = vpop.f32.mrb[0].mxu0
    %v1115 = vadd.f32 0.0, %v1114
    %v1116 = vpop.f32.mrb[0].mxu0
    %v1117 = vpop.f32.mrb[0].mxu0
    %1118 = vdwg.mxu0
    %v1121 = vrot.slane %v1113, 2
    %v1122 = vrot.slane %v1115, 2
    %v1125 = vadd.f32 %v1070, %v1121
    %v1126 = vadd.f32 %v1071, %v1122
    %v1127 = vtanh.pop %v1125
    %v1128 = vtanh.pop %v1126
    %v1129 = vmul.f32 %v1127, 0.5
    %v1130 = vmul.f32 %v1128, 0.5
    %v1131 = vadd.f32 %v1129, 0.5
    %v1132 = vadd.f32 %v1130, 0.5
    %v1134 = vrot.slane %v1063, 6
    %v1136 = vmul.f32 %v1131, %v1134
    %1138 = vrot.lane.b32.xlu0 %v1128, 64
    %v1139 = vpop.permute.xlu0 %1138
    %v1141 = vmul.f32 %v1131, %v1139
    %1143 = vrot.lane.b32.xlu0 %v1141, 64
    %v1144 = vpop.permute.xlu0 %1143
    %v1146 = vadd.f32 %v1136, %v1144
    %v1147 = vtanh.pop %v1146
    %1149 = vrot.lane.b32.xlu0 %v1147, 64
    %v1150 = vpop.permute.xlu0 %1149
    %v1152 = vmul.f32 %v1132, %v1150
    %v1153 = vld [vmem:[#allocation2 + $0x20] sm:$0x3]
    %v1154 = vld [vmem:[#allocation2 + $0x28] sm:$0x3]
    %v1155 = vpack.c.bf16 %v1152, %v1152
    %v1157 = vrot.slane %v1155, 3
    %v1159 = vsel %vm512, %v1157, 0
    %1161 = vmatprep.subr.bf16.mxu0 %v497
    %1162 = vmatpush1.bf16.msra.mxu0 %v496
    %1163 = vmatprep.subr.bf16.mxu0 %v499
    %1164 = vmatpush1.bf16.msra.mxu0 %v498
    %1165 = vmatprep.subr.bf16.mxu0 %v501
    %1166 = vmatpush1.bf16.msra.mxu0 %v500
    %1167 = vmatprep.subr.bf16.mxu0 %v503
    %1168 = vmatpush1.bf16.msra.mxu0 %v502
    %1169 = vmatprep.subr.bf16.mxu0 0
    %1170 = vmatpush1.bf16.msra.mxu0 0
    %1171 = vmatprep.subr.bf16.mxu0 0
    %1172 = vmatpush1.bf16.msra.mxu0 0
    %1173 = vmatprep.subr.bf16.mxu0 0
    %1174 = vmatpush1.bf16.msra.mxu0 0
    %1175 = vmatprep.subr.bf16.mxu0 0
    %1176 = vmatpush1.bf16.msra.mxu0 0
    %1177 = vmatprep.subr.bf16.mxu0 0
    %1178 = vmatpush1.bf16.msra.mxu0 0
    %1179 = vmatprep.subr.bf16.mxu0 0
    %1180 = vmatpush1.bf16.msra.mxu0 0
    %1181 = vmatprep.subr.bf16.mxu0 0
    %1182 = vmatpush1.bf16.msra.mxu0 0
    %1183 = vmatprep.subr.bf16.mxu0 0
    %1184 = vmatpush1.bf16.msra.mxu0 0
    %1185 = vmatprep.subr.bf16.mxu0 0
    %1186 = vmatpush1.bf16.msra.mxu0 0
    %1187 = vmatprep.subr.bf16.mxu0 0
    %1188 = vmatpush1.bf16.msra.mxu0 0
    %1189 = vmatprep.subr.bf16.mxu0 0
    %1190 = vmatpush1.bf16.msra.mxu0 0
    %1191 = vmatprep.subr.bf16.mxu0 0
    %1192 = vmatpush1.bf16.msra.mxu0 0
    %1193 = vmatprep.mubr.bf16.mxu0 0
    %1194 = vmatmul.mubr.bf16.gmra.mrb[0].mxu0 %v1159
    %v1195 = vpop.f32.mrb[0].mxu0
    %v1196 = vadd.f32 0.0, %v1195
    %v1197 = vpop.f32.mrb[0].mxu0
    %v1198 = vadd.f32 0.0, %v1197
    %v1199 = vpop.f32.mrb[0].mxu0
    %v1200 = vpop.f32.mrb[0].mxu0
    %1201 = vdwg.mxu0
    %v1202 = vadd.f32 %v1153, %v1196
    %v1203 = vadd.f32 %v1154, %v1198
    %v1204 = vtanh.pop %v1202
    %v1205 = vtanh.pop %v1203
    %v1206 = vmul.f32 %v1204, 0.5
    %v1207 = vmul.f32 %v1205, 0.5
    %v1208 = vadd.f32 %v1206, 0.5
    %v1209 = vadd.f32 %v1207, 0.5
    %v1211 = vrot.slane %v1146, 6
    %v1213 = vmul.f32 %v1208, %v1211
    %1215 = vrot.lane.b32.xlu0 %v1205, 64
    %v1216 = vpop.permute.xlu0 %1215
    %v1218 = vmul.f32 %v1208, %v1216
    %1220 = vrot.lane.b32.xlu0 %v1218, 64
    %v1221 = vpop.permute.xlu0 %1220
    %v1223 = vadd.f32 %v1213, %v1221
    %v1224 = vtanh.pop %v1223
    %1226 = vrot.lane.b32.xlu0 %v1224, 64
    %v1227 = vpop.permute.xlu0 %1226
    %v1229 = vmul.f32 %v1209, %v1227
    %v1230 = vld [vmem:[#allocation2 + $0x20] sm:$0xc]
    %v1231 = vld [vmem:[#allocation2 + $0x28] sm:$0xc]
    %v1232 = vpack.c.bf16 %v1229, %v1229
    %v1234 = vsel %vm512, %v1232, 0
    %1236 = vmatprep.subr.bf16.mxu0 %v497
    %1237 = vmatpush1.bf16.msra.mxu0 %v496
    %1238 = vmatprep.subr.bf16.mxu0 %v499
    %1239 = vmatpush1.bf16.msra.mxu0 %v498
    %1240 = vmatprep.subr.bf16.mxu0 %v501
    %1241 = vmatpush1.bf16.msra.mxu0 %v500
    %1242 = vmatprep.subr.bf16.mxu0 %v503
    %1243 = vmatpush1.bf16.msra.mxu0 %v502
    %1244 = vmatprep.subr.bf16.mxu0 0
    %1245 = vmatpush1.bf16.msra.mxu0 0
    %1246 = vmatprep.subr.bf16.mxu0 0
    %1247 = vmatpush1.bf16.msra.mxu0 0
    %1248 = vmatprep.subr.bf16.mxu0 0
    %1249 = vmatpush1.bf16.msra.mxu0 0
    %1250 = vmatprep.subr.bf16.mxu0 0
    %1251 = vmatpush1.bf16.msra.mxu0 0
    %1252 = vmatprep.subr.bf16.mxu0 0
    %1253 = vmatpush1.bf16.msra.mxu0 0
    %1254 = vmatprep.subr.bf16.mxu0 0
    %1255 = vmatpush1.bf16.msra.mxu0 0
    %1256 = vmatprep.subr.bf16.mxu0 0
    %1257 = vmatpush1.bf16.msra.mxu0 0
    %1258 = vmatprep.subr.bf16.mxu0 0
    %1259 = vmatpush1.bf16.msra.mxu0 0
    %1260 = vmatprep.subr.bf16.mxu0 0
    %1261 = vmatpush1.bf16.msra.mxu0 0
    %1262 = vmatprep.subr.bf16.mxu0 0
    %1263 = vmatpush1.bf16.msra.mxu0 0
    %1264 = vmatprep.subr.bf16.mxu0 0
    %1265 = vmatpush1.bf16.msra.mxu0 0
    %1266 = vmatprep.subr.bf16.mxu0 0
    %1267 = vmatpush1.bf16.msra.mxu0 0
    %1268 = vmatprep.mubr.bf16.mxu0 0
    %1269 = vmatmul.mubr.bf16.gmra.mrb[0].mxu0 %v1234
    %v1270 = vpop.f32.mrb[0].mxu0
    %v1271 = vadd.f32 0.0, %v1270
    %v1272 = vpop.f32.mrb[0].mxu0
    %v1273 = vadd.f32 0.0, %v1272
    %v1274 = vpop.f32.mrb[0].mxu0
    %v1275 = vpop.f32.mrb[0].mxu0
    %1276 = vdwg.mxu0
    %v1279 = vrot.slane %v1271, 6
    %v1280 = vrot.slane %v1273, 6
    %v1283 = vadd.f32 %v1230, %v1279
    %v1284 = vadd.f32 %v1231, %v1280
    %v1285 = vtanh.pop %v1283
    %v1286 = vtanh.pop %v1284
    %v1287 = vmul.f32 %v1285, 0.5
    %v1288 = vmul.f32 %v1286, 0.5
    %v1289 = vadd.f32 %v1287, 0.5
    %v1290 = vadd.f32 %v1288, 0.5
    %v1292 = vrot.slane %v1223, 6
    %v1294 = vmul.f32 %v1289, %v1292
    %1296 = vrot.lane.b32.xlu0 %v1286, 64
    %v1297 = vpop.permute.xlu0 %1296
    %v1299 = vmul.f32 %v1289, %v1297
    %1301 = vrot.lane.b32.xlu0 %v1299, 64
    %v1302 = vpop.permute.xlu0 %1301
    %v1304 = vadd.f32 %v1294, %v1302
    %v1305 = vtanh.pop %v1304
    %1307 = vrot.lane.b32.xlu0 %v1305, 64
    %v1308 = vpop.permute.xlu0 %1307
    %v1310 = vmul.f32 %v1290, %v1308
    %v1311 = vld [vmem:[#allocation2 + $0x20] sm:$0x30]
    %v1312 = vld [vmem:[#allocation2 + $0x28] sm:$0x30]
    %v1313 = vpack.c.bf16 %v1310, %v1310
    %v1315 = vrot.slane %v1313, 1
    %v1317 = vsel %vm512, %v1315, 0
    %1319 = vmatprep.subr.bf16.mxu0 %v497
    %1320 = vmatpush1.bf16.msra.mxu0 %v496
    %1321 = vmatprep.subr.bf16.mxu0 %v499
    %1322 = vmatpush1.bf16.msra.mxu0 %v498
    %1323 = vmatprep.subr.bf16.mxu0 %v501
    %1324 = vmatpush1.bf16.msra.mxu0 %v500
    %1325 = vmatprep.subr.bf16.mxu0 %v503
    %1326 = vmatpush1.bf16.msra.mxu0 %v502
    %1327 = vmatprep.subr.bf16.mxu0 0
    %1328 = vmatpush1.bf16.msra.mxu0 0
    %1329 = vmatprep.subr.bf16.mxu0 0
    %1330 = vmatpush1.bf16.msra.mxu0 0
    %1331 = vmatprep.subr.bf16.mxu0 0
    %1332 = vmatpush1.bf16.msra.mxu0 0
    %1333 = vmatprep.subr.bf16.mxu0 0
    %1334 = vmatpush1.bf16.msra.mxu0 0
    %1335 = vmatprep.subr.bf16.mxu0 0
    %1336 = vmatpush1.bf16.msra.mxu0 0
    %1337 = vmatprep.subr.bf16.mxu0 0
    %1338 = vmatpush1.bf16.msra.mxu0 0
    %1339 = vmatprep.subr.bf16.mxu0 0
    %1340 = vmatpush1.bf16.msra.mxu0 0
    %1341 = vmatprep.subr.bf16.mxu0 0
    %1342 = vmatpush1.bf16.msra.mxu0 0
    %1343 = vmatprep.subr.bf16.mxu0 0
    %1344 = vmatpush1.bf16.msra.mxu0 0
    %1345 = vmatprep.subr.bf16.mxu0 0
    %1346 = vmatpush1.bf16.msra.mxu0 0
    %1347 = vmatprep.subr.bf16.mxu0 0
    %1348 = vmatpush1.bf16.msra.mxu0 0
    %1349 = vmatprep.subr.bf16.mxu0 0
    %1350 = vmatpush1.bf16.msra.mxu0 0
    %1351 = vmatprep.mubr.bf16.mxu0 0
    %1352 = vmatmul.mubr.bf16.gmra.mrb[0].mxu0 %v1317
    %v1353 = vpop.f32.mrb[0].mxu0
    %v1354 = vadd.f32 0.0, %v1353
    %v1355 = vpop.f32.mrb[0].mxu0
    %v1356 = vadd.f32 0.0, %v1355
    %v1357 = vpop.f32.mrb[0].mxu0
    %v1358 = vpop.f32.mrb[0].mxu0
    %1359 = vdwg.mxu0
    %v1362 = vrot.slane %v1354, 4
    %v1363 = vrot.slane %v1356, 4
    %v1366 = vadd.f32 %v1311, %v1362
    %v1367 = vadd.f32 %v1312, %v1363
    %v1368 = vtanh.pop %v1366
    %v1369 = vtanh.pop %v1367
    %v1370 = vmul.f32 %v1368, 0.5
    %v1371 = vmul.f32 %v1369, 0.5
    %v1372 = vadd.f32 %v1370, 0.5
    %v1373 = vadd.f32 %v1371, 0.5
    %v1375 = vrot.slane %v1304, 6
    %v1377 = vmul.f32 %v1372, %v1375
    %1379 = vrot.lane.b32.xlu0 %v1369, 64
    %v1380 = vpop.permute.xlu0 %1379
    %v1382 = vmul.f32 %v1372, %v1380
    %1384 = vrot.lane.b32.xlu0 %v1382, 64
    %v1385 = vpop.permute.xlu0 %1384
    %v1387 = vadd.f32 %v1377, %v1385
    %v1388 = vtanh.pop %v1387
    %1390 = vrot.lane.b32.xlu0 %v1388, 64
    %v1391 = vpop.permute.xlu0 %1390
    %v1393 = vmul.f32 %v1373, %v1391
    %v1394 = vld [vmem:[#allocation2 + $0x20] sm:$0xc0]
    %v1395 = vld [vmem:[#allocation2 + $0x28] sm:$0xc0]
    %v1396 = vpack.c.bf16 %v1393, %v1393
    %v1398 = vrot.slane %v1396, 2
    %v1400 = vsel %vm512, %v1398, 0
    %1402 = vmatprep.subr.bf16.mxu0 %v497
    %1403 = vmatpush1.bf16.msra.mxu0 %v496
    %1404 = vmatprep.subr.bf16.mxu0 %v499
    %1405 = vmatpush1.bf16.msra.mxu0 %v498
    %1406 = vmatprep.subr.bf16.mxu0 %v501
    %1407 = vmatpush1.bf16.msra.mxu0 %v500
    %1408 = vmatprep.subr.bf16.mxu0 %v503
    %1409 = vmatpush1.bf16.msra.mxu0 %v502
    %1410 = vmatprep.subr.bf16.mxu0 0
    %1411 = vmatpush1.bf16.msra.mxu0 0
    %1412 = vmatprep.subr.bf16.mxu0 0
    %1413 = vmatpush1.bf16.msra.mxu0 0
    %1414 = vmatprep.subr.bf16.mxu0 0
    %1415 = vmatpush1.bf16.msra.mxu0 0
    %1416 = vmatprep.subr.bf16.mxu0 0
    %1417 = vmatpush1.bf16.msra.mxu0 0
    %1418 = vmatprep.subr.bf16.mxu0 0
    %1419 = vmatpush1.bf16.msra.mxu0 0
    %1420 = vmatprep.subr.bf16.mxu0 0
    %1421 = vmatpush1.bf16.msra.mxu0 0
    %1422 = vmatprep.subr.bf16.mxu0 0
    %1423 = vmatpush1.bf16.msra.mxu0 0
    %1424 = vmatprep.subr.bf16.mxu0 0
    %1425 = vmatpush1.bf16.msra.mxu0 0
    %1426 = vmatprep.subr.bf16.mxu0 0
    %1427 = vmatpush1.bf16.msra.mxu0 0
    %1428 = vmatprep.subr.bf16.mxu0 0
    %1429 = vmatpush1.bf16.msra.mxu0 0
    %1430 = vmatprep.subr.bf16.mxu0 0
    %1431 = vmatpush1.bf16.msra.mxu0 0
    %1432 = vmatprep.subr.bf16.mxu0 0
    %1433 = vmatpush1.bf16.msra.mxu0 0
    %1434 = vmatprep.mubr.bf16.mxu0 0
    %1435 = vmatmul.mubr.bf16.gmra.mrb[0].mxu0 %v1400
    %v1436 = vpop.f32.mrb[0].mxu0
    %v1437 = vadd.f32 0.0, %v1436
    %v1438 = vpop.f32.mrb[0].mxu0
    %v1439 = vadd.f32 0.0, %v1438
    %v1440 = vpop.f32.mrb[0].mxu0
    %v1441 = vpop.f32.mrb[0].mxu0
    %1442 = vdwg.mxu0
    %v1445 = vrot.slane %v1437, 2
    %v1446 = vrot.slane %v1439, 2
    %v1449 = vadd.f32 %v1394, %v1445
    %v1450 = vadd.f32 %v1395, %v1446
    %v1451 = vtanh.pop %v1449
    %v1452 = vtanh.pop %v1450
    %v1453 = vmul.f32 %v1451, 0.5
    %v1454 = vmul.f32 %v1452, 0.5
    %v1455 = vadd.f32 %v1453, 0.5
    %v1456 = vadd.f32 %v1454, 0.5
    %v1458 = vrot.slane %v1387, 6
    %v1460 = vmul.f32 %v1455, %v1458
    %1462 = vrot.lane.b32.xlu0 %v1452, 64
    %v1463 = vpop.permute.xlu0 %1462
    %v1465 = vmul.f32 %v1455, %v1463
    %1467 = vrot.lane.b32.xlu0 %v1465, 64
    %v1468 = vpop.permute.xlu0 %1467
    %v1470 = vadd.f32 %v1460, %v1468
    %v1471 = vtanh.pop %v1470
    %1473 = vrot.lane.b32.xlu0 %v1471, 64
    %v1474 = vpop.permute.xlu0 %1473
    %v1476 = vmul.f32 %v1456, %v1474
    %v1477 = vld [vmem:[#allocation2 + $0x30] sm:$0x3]
    %v1478 = vld [vmem:[#allocation2 + $0x38] sm:$0x3]
    %v1479 = vpack.c.bf16 %v1476, %v1476
    %v1481 = vrot.slane %v1479, 3
    %v1483 = vsel %vm512, %v1481, 0
    %1485 = vmatprep.subr.bf16.mxu0 %v497
    %1486 = vmatpush1.bf16.msra.mxu0 %v496
    %1487 = vmatprep.subr.bf16.mxu0 %v499
    %1488 = vmatpush1.bf16.msra.mxu0 %v498
    %1489 = vmatprep.subr.bf16.mxu0 %v501
    %1490 = vmatpush1.bf16.msra.mxu0 %v500
    %1491 = vmatprep.subr.bf16.mxu0 %v503
    %1492 = vmatpush1.bf16.msra.mxu0 %v502
    %1493 = vmatprep.subr.bf16.mxu0 0
    %1494 = vmatpush1.bf16.msra.mxu0 0
    %1495 = vmatprep.subr.bf16.mxu0 0
    %1496 = vmatpush1.bf16.msra.mxu0 0
    %1497 = vmatprep.subr.bf16.mxu0 0
    %1498 = vmatpush1.bf16.msra.mxu0 0
    %1499 = vmatprep.subr.bf16.mxu0 0
    %1500 = vmatpush1.bf16.msra.mxu0 0
    %1501 = vmatprep.subr.bf16.mxu0 0
    %1502 = vmatpush1.bf16.msra.mxu0 0
    %1503 = vmatprep.subr.bf16.mxu0 0
    %1504 = vmatpush1.bf16.msra.mxu0 0
    %1505 = vmatprep.subr.bf16.mxu0 0
    %1506 = vmatpush1.bf16.msra.mxu0 0
    %1507 = vmatprep.subr.bf16.mxu0 0
    %1508 = vmatpush1.bf16.msra.mxu0 0
    %1509 = vmatprep.subr.bf16.mxu0 0
    %1510 = vmatpush1.bf16.msra.mxu0 0
    %1511 = vmatprep.subr.bf16.mxu0 0
    %1512 = vmatpush1.bf16.msra.mxu0 0
    %1513 = vmatprep.subr.bf16.mxu0 0
    %1514 = vmatpush1.bf16.msra.mxu0 0
    %1515 = vmatprep.subr.bf16.mxu0 0
    %1516 = vmatpush1.bf16.msra.mxu0 0
    %1517 = vmatprep.mubr.bf16.mxu0 0
    %1518 = vmatmul.mubr.bf16.gmra.mrb[0].mxu0 %v1483
    %v1519 = vpop.f32.mrb[0].mxu0
    %v1520 = vadd.f32 0.0, %v1519
    %v1521 = vpop.f32.mrb[0].mxu0
    %v1522 = vadd.f32 0.0, %v1521
    %v1523 = vpop.f32.mrb[0].mxu0
    %v1524 = vpop.f32.mrb[0].mxu0
    %1525 = vdwg.mxu0
    %v1526 = vadd.f32 %v1477, %v1520
    %v1527 = vadd.f32 %v1478, %v1522
    %v1528 = vtanh.pop %v1526
    %v1529 = vtanh.pop %v1527
    %v1530 = vmul.f32 %v1528, 0.5
    %v1531 = vmul.f32 %v1529, 0.5
    %v1532 = vadd.f32 %v1530, 0.5
    %v1533 = vadd.f32 %v1531, 0.5
    %v1535 = vrot.slane %v1470, 6
    %v1537 = vmul.f32 %v1532, %v1535
    %1539 = vrot.lane.b32.xlu0 %v1529, 64
    %v1540 = vpop.permute.xlu0 %1539
    %v1542 = vmul.f32 %v1532, %v1540
    %1544 = vrot.lane.b32.xlu0 %v1542, 64
    %v1545 = vpop.permute.xlu0 %1544
    %v1547 = vadd.f32 %v1537, %v1545
    %v1548 = vtanh.pop %v1547
    %1550 = vrot.lane.b32.xlu0 %v1548, 64
    %v1551 = vpop.permute.xlu0 %1550
    %v1553 = vmul.f32 %v1533, %v1551
    %v1554 = vld [vmem:[#allocation2 + $0x30] sm:$0xc]
    %v1555 = vld [vmem:[#allocation2 + $0x38] sm:$0xc]
    %v1556 = vpack.c.bf16 %v1553, %v1553
    %v1558 = vsel %vm512, %v1556, 0
    %1560 = vmatprep.subr.bf16.mxu0 %v497
    %1561 = vmatpush1.bf16.msra.mxu0 %v496
    %1562 = vmatprep.subr.bf16.mxu0 %v499
    %1563 = vmatpush1.bf16.msra.mxu0 %v498
    %1564 = vmatprep.subr.bf16.mxu0 %v501
    %1565 = vmatpush1.bf16.msra.mxu0 %v500
    %1566 = vmatprep.subr.bf16.mxu0 %v503
    %1567 = vmatpush1.bf16.msra.mxu0 %v502
    %1568 = vmatprep.subr.bf16.mxu0 0
    %1569 = vmatpush1.bf16.msra.mxu0 0
    %1570 = vmatprep.subr.bf16.mxu0 0
    %1571 = vmatpush1.bf16.msra.mxu0 0
    %1572 = vmatprep.subr.bf16.mxu0 0
    %1573 = vmatpush1.bf16.msra.mxu0 0
    %1574 = vmatprep.subr.bf16.mxu0 0
    %1575 = vmatpush1.bf16.msra.mxu0 0
    %1576 = vmatprep.subr.bf16.mxu0 0
    %1577 = vmatpush1.bf16.msra.mxu0 0
    %1578 = vmatprep.subr.bf16.mxu0 0
    %1579 = vmatpush1.bf16.msra.mxu0 0
    %1580 = vmatprep.subr.bf16.mxu0 0
    %1581 = vmatpush1.bf16.msra.mxu0 0
    %1582 = vmatprep.subr.bf16.mxu0 0
    %1583 = vmatpush1.bf16.msra.mxu0 0
    %1584 = vmatprep.subr.bf16.mxu0 0
    %1585 = vmatpush1.bf16.msra.mxu0 0
    %1586 = vmatprep.subr.bf16.mxu0 0
    %1587 = vmatpush1.bf16.msra.mxu0 0
    %1588 = vmatprep.subr.bf16.mxu0 0
    %1589 = vmatpush1.bf16.msra.mxu0 0
    %1590 = vmatprep.subr.bf16.mxu0 0
    %1591 = vmatpush1.bf16.msra.mxu0 0
    %1592 = vmatprep.mubr.bf16.mxu0 0
    %1593 = vmatmul.mubr.bf16.gmra.mrb[0].mxu0 %v1558
    %v1594 = vpop.f32.mrb[0].mxu0
    %v1595 = vadd.f32 0.0, %v1594
    %v1596 = vpop.f32.mrb[0].mxu0
    %v1597 = vadd.f32 0.0, %v1596
    %v1598 = vpop.f32.mrb[0].mxu0
    %v1599 = vpop.f32.mrb[0].mxu0
    %1600 = vdwg.mxu0
    %v1603 = vrot.slane %v1595, 6
    %v1604 = vrot.slane %v1597, 6
    %v1607 = vadd.f32 %v1554, %v1603
    %v1608 = vadd.f32 %v1555, %v1604
    %v1609 = vtanh.pop %v1607
    %v1610 = vtanh.pop %v1608
    %v1611 = vmul.f32 %v1609, 0.5
    %v1612 = vmul.f32 %v1610, 0.5
    %v1613 = vadd.f32 %v1611, 0.5
    %v1614 = vadd.f32 %v1612, 0.5
    %v1616 = vrot.slane %v1547, 6
    %v1618 = vmul.f32 %v1613, %v1616
    %1620 = vrot.lane.b32.xlu0 %v1610, 64
    %v1621 = vpop.permute.xlu0 %1620
    %v1623 = vmul.f32 %v1613, %v1621
    %1625 = vrot.lane.b32.xlu0 %v1623, 64
    %v1626 = vpop.permute.xlu0 %1625
    %v1628 = vadd.f32 %v1618, %v1626
    %v1629 = vtanh.pop %v1628
    %1631 = vrot.lane.b32.xlu0 %v1629, 64
    %v1632 = vpop.permute.xlu0 %1631
    %v1634 = vmul.f32 %v1614, %v1632
    %v1635 = vld [vmem:[#allocation2 + $0x30] sm:$0x30]
    %v1636 = vld [vmem:[#allocation2 + $0x38] sm:$0x30]
    %v1637 = vpack.c.bf16 %v1634, %v1634
    %v1639 = vrot.slane %v1637, 1
    %v1641 = vsel %vm512, %v1639, 0
    %1643 = vmatprep.subr.bf16.mxu0 %v497
    %1644 = vmatpush1.bf16.msra.mxu0 %v496
    %1645 = vmatprep.subr.bf16.mxu0 %v499
    %1646 = vmatpush1.bf16.msra.mxu0 %v498
    %1647 = vmatprep.subr.bf16.mxu0 %v501
    %1648 = vmatpush1.bf16.msra.mxu0 %v500
    %1649 = vmatprep.subr.bf16.mxu0 %v503
    %1650 = vmatpush1.bf16.msra.mxu0 %v502
    %1651 = vmatprep.subr.bf16.mxu0 0
    %1652 = vmatpush1.bf16.msra.mxu0 0
    %1653 = vmatprep.subr.bf16.mxu0 0
    %1654 = vmatpush1.bf16.msra.mxu0 0
    %1655 = vmatprep.subr.bf16.mxu0 0
    %1656 = vmatpush1.bf16.msra.mxu0 0
    %1657 = vmatprep.subr.bf16.mxu0 0
    %1658 = vmatpush1.bf16.msra.mxu0 0
    %1659 = vmatprep.subr.bf16.mxu0 0
    %1660 = vmatpush1.bf16.msra.mxu0 0
    %1661 = vmatprep.subr.bf16.mxu0 0
    %1662 = vmatpush1.bf16.msra.mxu0 0
    %1663 = vmatprep.subr.bf16.mxu0 0
    %1664 = vmatpush1.bf16.msra.mxu0 0
    %1665 = vmatprep.subr.bf16.mxu0 0
    %1666 = vmatpush1.bf16.msra.mxu0 0
    %1667 = vmatprep.subr.bf16.mxu0 0
    %1668 = vmatpush1.bf16.msra.mxu0 0
    %1669 = vmatprep.subr.bf16.mxu0 0
    %1670 = vmatpush1.bf16.msra.mxu0 0
    %1671 = vmatprep.subr.bf16.mxu0 0
    %1672 = vmatpush1.bf16.msra.mxu0 0
    %1673 = vmatprep.subr.bf16.mxu0 0
    %1674 = vmatpush1.bf16.msra.mxu0 0
    %1675 = vmatprep.mubr.bf16.mxu0 0
    %1676 = vmatmul.mubr.bf16.gmra.mrb[0].mxu0 %v1641
    %v1677 = vpop.f32.mrb[0].mxu0
    %v1678 = vadd.f32 0.0, %v1677
    %v1679 = vpop.f32.mrb[0].mxu0
    %v1680 = vadd.f32 0.0, %v1679
    %v1681 = vpop.f32.mrb[0].mxu0
    %v1682 = vpop.f32.mrb[0].mxu0
    %1683 = vdwg.mxu0
    %v1686 = vrot.slane %v1678, 4
    %v1687 = vrot.slane %v1680, 4
    %v1690 = vadd.f32 %v1635, %v1686
    %v1691 = vadd.f32 %v1636, %v1687
    %v1692 = vtanh.pop %v1690
    %v1693 = vtanh.pop %v1691
    %v1694 = vmul.f32 %v1692, 0.5
    %v1695 = vmul.f32 %v1693, 0.5
    %v1696 = vadd.f32 %v1694, 0.5
    %v1697 = vadd.f32 %v1695, 0.5
    %v1699 = vrot.slane %v1628, 6
    %v1701 = vmul.f32 %v1696, %v1699
    %1703 = vrot.lane.b32.xlu0 %v1693, 64
    %v1704 = vpop.permute.xlu0 %1703
    %v1706 = vmul.f32 %v1696, %v1704
    %1708 = vrot.lane.b32.xlu0 %v1706, 64
    %v1709 = vpop.permute.xlu0 %1708
    %v1711 = vadd.f32 %v1701, %v1709
    %v1712 = vtanh.pop %v1711
    %1714 = vrot.lane.b32.xlu0 %v1712, 64
    %v1715 = vpop.permute.xlu0 %1714
    %v1717 = vmul.f32 %v1697, %v1715
    %v1718 = vld [vmem:[#allocation2 + $0x30] sm:$0xc0]
    %v1719 = vld [vmem:[#allocation2 + $0x38] sm:$0xc0]
    %v1720 = vpack.c.bf16 %v1717, %v1717
    %v1722 = vrot.slane %v1720, 2
    %v1724 = vsel %vm512, %v1722, 0
    %1726 = vmatprep.subr.bf16.mxu0 %v497
    %1727 = vmatpush1.bf16.msra.mxu0 %v496
    %1728 = vmatprep.subr.bf16.mxu0 %v499
    %1729 = vmatpush1.bf16.msra.mxu0 %v498
    %1730 = vmatprep.subr.bf16.mxu0 %v501
    %1731 = vmatpush1.bf16.msra.mxu0 %v500
    %1732 = vmatprep.subr.bf16.mxu0 %v503
    %1733 = vmatpush1.bf16.msra.mxu0 %v502
    %1734 = vmatprep.subr.bf16.mxu0 0
    %1735 = vmatpush1.bf16.msra.mxu0 0
    %1736 = vmatprep.subr.bf16.mxu0 0
    %1737 = vmatpush1.bf16.msra.mxu0 0
    %1738 = vmatprep.subr.bf16.mxu0 0
    %1739 = vmatpush1.bf16.msra.mxu0 0
    %1740 = vmatprep.subr.bf16.mxu0 0
    %1741 = vmatpush1.bf16.msra.mxu0 0
    %1742 = vmatprep.subr.bf16.mxu0 0
    %1743 = vmatpush1.bf16.msra.mxu0 0
    %1744 = vmatprep.subr.bf16.mxu0 0
    %1745 = vmatpush1.bf16.msra.mxu0 0
    %1746 = vmatprep.subr.bf16.mxu0 0
    %1747 = vmatpush1.bf16.msra.mxu0 0
    %1748 = vmatprep.subr.bf16.mxu0 0
    %1749 = vmatpush1.bf16.msra.mxu0 0
    %1750 = vmatprep.subr.bf16.mxu0 0
    %1751 = vmatpush1.bf16.msra.mxu0 0
    %1752 = vmatprep.subr.bf16.mxu0 0
    %1753 = vmatpush1.bf16.msra.mxu0 0
    %1754 = vmatprep.subr.bf16.mxu0 0
    %1755 = vmatpush1.bf16.msra.mxu0 0
    %1756 = vmatprep.subr.bf16.mxu0 0
    %1757 = vmatpush1.bf16.msra.mxu0 0
    %1758 = vmatprep.mubr.bf16.mxu0 0
    %1759 = vmatmul.mubr.bf16.gmra.mrb[0].mxu0 %v1724
    %v1760 = vpop.f32.mrb[0].mxu0
    %v1761 = vadd.f32 0.0, %v1760
    %v1762 = vpop.f32.mrb[0].mxu0
    %v1763 = vadd.f32 0.0, %v1762
    %v1764 = vpop.f32.mrb[0].mxu0
    %v1765 = vpop.f32.mrb[0].mxu0
    %1766 = vdwg.mxu0
    %v1769 = vrot.slane %v1761, 2
    %v1770 = vrot.slane %v1763, 2
    %v1773 = vadd.f32 %v1718, %v1769
    %v1774 = vadd.f32 %v1719, %v1770
    %v1775 = vtanh.pop %v1773
    %v1776 = vtanh.pop %v1774
    %v1777 = vmul.f32 %v1775, 0.5
    %v1778 = vmul.f32 %v1776, 0.5
    %v1779 = vadd.f32 %v1777, 0.5
    %v1780 = vadd.f32 %v1778, 0.5
    %v1782 = vrot.slane %v1711, 6
    %v1784 = vmul.f32 %v1779, %v1782
    %1786 = vrot.lane.b32.xlu0 %v1776, 64
    %v1787 = vpop.permute.xlu0 %1786
    %v1789 = vmul.f32 %v1779, %v1787
    %1791 = vrot.lane.b32.xlu0 %v1789, 64
    %v1792 = vpop.permute.xlu0 %1791
    %v1794 = vadd.f32 %v1784, %v1792
    %v1795 = vtanh.pop %v1794
    %1797 = vrot.lane.b32.xlu0 %v1795, 64
    %v1798 = vpop.permute.xlu0 %1797
    %v1800 = vmul.f32 %v1780, %v1798
    %v1801 = vtanh.pop %v456
    %v1802 = vtanh.pop %v458
    %v1803 = vmul.f32 %v1801, 0.5
    %v1804 = vmul.f32 %v1802, 0.5
    %v1805 = vadd.f32 %v1803, 0.5
    %v1806 = vadd.f32 %v1804, 0.5
    %1808 = vrot.lane.b32.xlu0 %v1802, 64
    %v1809 = vpop.permute.xlu0 %1808
    %v1811 = vmul.f32 %v1805, %v1809
    %v1812 = vtanh.pop %v1811
    %v1813 = vmul.f32 %v1806, %v1812
    %v1814 = vld [vmem:[%s9] sm:$0xff]
    %v1815 = vld [vmem:[%s9 + $0x8] sm:$0xff]
    %v1816 = vld [vmem:[%s9 + $0x10] sm:$0xff]
    %v1817 = vld [vmem:[%s9 + $0x18] sm:$0xff]
    %v1818 = vld [vmem:[%s9 + $0x20] sm:$0xff]
    %v1819 = vld [vmem:[%s9 + $0x28] sm:$0xff]
    %v1820 = vld [vmem:[%s9 + $0x30] sm:$0xff]
    %v1821 = vld [vmem:[%s9 + $0x38] sm:$0xff]
    %v1822 = vld [vmem:[#allocation15] sm:$0xff]
    %v1823 = vld [vmem:[#allocation15 + $0x8] sm:$0xff]
    %v1824 = vld [vmem:[#allocation15 + $0x10] sm:$0xff]
    %v1825 = vld [vmem:[#allocation15 + $0x18] sm:$0xff]
    %v1826 = vld [vmem:[#allocation15 + $0x20] sm:$0xff]
    %v1827 = vld [vmem:[#allocation15 + $0x28] sm:$0xff]
    %v1828 = vld [vmem:[#allocation15 + $0x30] sm:$0xff]
    %v1829 = vld [vmem:[#allocation15 + $0x38] sm:$0xff]
    %v1831 = vsel %vm512, %v1813, 0
    %1833 = vmatprep.subr.mxu0 0.0
    %1834 = vmatpush1.msra.mxu0 %v1822
    %1835 = vmatprep.subr.mxu0 0.0
    %1836 = vmatpush1.msra.mxu0 %v1823
    %1837 = vmatprep.subr.mxu0 0.0
    %1838 = vmatpush1.msra.mxu0 %v1824
    %1839 = vmatprep.subr.mxu0 0.0
    %1840 = vmatpush1.msra.mxu0 %v1825
    %1841 = vmatprep.subr.mxu0 0.0
    %1842 = vmatpush1.msra.mxu0 %v1826
    %1843 = vmatprep.subr.mxu0 0.0
    %1844 = vmatpush1.msra.mxu0 %v1827
    %1845 = vmatprep.subr.mxu0 0.0
    %1846 = vmatpush1.msra.mxu0 %v1828
    %1847 = vmatprep.subr.mxu0 0.0
    %1848 = vmatpush1.msra.mxu0 %v1829
    %1849 = vmatprep.subr.mxu0 0.0
    %1850 = vmatpush1.msra.mxu0 0.0
    %1851 = vmatprep.subr.mxu0 0.0
    %1852 = vmatpush1.msra.mxu0 0.0
    %1853 = vmatprep.subr.mxu0 0.0
    %1854 = vmatpush1.msra.mxu0 0.0
    %1855 = vmatprep.subr.mxu0 0.0
    %1856 = vmatpush1.msra.mxu0 0.0
    %1857 = vmatprep.subr.mxu0 0.0
    %1858 = vmatpush1.msra.mxu0 0.0
    %1859 = vmatprep.subr.mxu0 0.0
    %1860 = vmatpush1.msra.mxu0 0.0
    %1861 = vmatprep.subr.mxu0 0.0
    %1862 = vmatpush1.msra.mxu0 0.0
    %1863 = vmatprep.subr.mxu0 0.0
    %1864 = vmatpush1.msra.mxu0 0.0
    %1865 = vmatprep.subr.mxu0 0.0
    %1866 = vmatpush1.msra.mxu0 0.0
    %1867 = vmatprep.subr.mxu0 0.0
    %1868 = vmatpush1.msra.mxu0 0.0
    %1869 = vmatprep.subr.mxu0 0.0
    %1870 = vmatpush1.msra.mxu0 0.0
    %1871 = vmatprep.subr.mxu0 0.0
    %1872 = vmatpush1.msra.mxu0 0.0
    %1873 = vmatprep.subr.mxu0 0.0
    %1874 = vmatpush1.msra.mxu0 0.0
    %1875 = vmatprep.subr.mxu0 0.0
    %1876 = vmatpush1.msra.mxu0 0.0
    %1877 = vmatprep.subr.mxu0 0.0
    %1878 = vmatpush1.msra.mxu0 0.0
    %1879 = vmatprep.subr.mxu0 0.0
    %1880 = vmatpush1.msra.mxu0 0.0
    %1881 = vmatprep.subr.mxu0 0.0
    %1882 = vmatpush1.msra.mxu0 0.0
    %1883 = vmatprep.subr.mxu0 0.0
    %1884 = vmatpush1.msra.mxu0 0.0
    %1885 = vmatprep.subr.mxu0 0.0
    %1886 = vmatpush1.msra.mxu0 0.0
    %1887 = vmatprep.subr.mxu0 0.0
    %1888 = vmatpush1.msra.mxu0 0.0
    %1889 = vmatprep.subr.mxu0 0.0
    %1890 = vmatpush1.msra.mxu0 0.0
    %1891 = vmatprep.subr.mxu0 0.0
    %1892 = vmatpush1.msra.mxu0 0.0
    %1893 = vmatprep.subr.mxu0 0.0
    %1894 = vmatpush1.msra.mxu0 0.0
    %1895 = vmatprep.subr.mxu0 0.0
    %1896 = vmatpush1.msra.mxu0 0.0
    %1897 = vmatprep.mubr.f32.mxu0 0.0
    %1898 = vmatmul.mubr.f32.gmra.mrb[0].mxu0 %v1831
    %v1899 = vpop.f32.mrb[0].mxu0
    %v1900 = vadd.f32 0.0, %v1899
    %v1901 = vpop.f32.mrb[0].mxu0
    %1902 = vdwg.mxu0
    %v1904 = vrot.slane %v1800, 6
    %v1905 = vsel %vm512, %v1904, 0
    %1907 = vmatprep.subr.mxu0 0.0
    %1908 = vmatpush1.msra.mxu0 %v1814
    %1909 = vmatprep.subr.mxu0 0.0
    %1910 = vmatpush1.msra.mxu0 %v1815
    %1911 = vmatprep.subr.mxu0 0.0
    %1912 = vmatpush1.msra.mxu0 %v1816
    %1913 = vmatprep.subr.mxu0 0.0
    %1914 = vmatpush1.msra.mxu0 %v1817
    %1915 = vmatprep.subr.mxu0 0.0
    %1916 = vmatpush1.msra.mxu0 %v1818
    %1917 = vmatprep.subr.mxu0 0.0
    %1918 = vmatpush1.msra.mxu0 %v1819
    %1919 = vmatprep.subr.mxu0 0.0
    %1920 = vmatpush1.msra.mxu0 %v1820
    %1921 = vmatprep.subr.mxu0 0.0
    %1922 = vmatpush1.msra.mxu0 %v1821
    %1923 = vmatprep.subr.mxu0 0.0
    %1924 = vmatpush1.msra.mxu0 0.0
    %1925 = vmatprep.subr.mxu0 0.0
    %1926 = vmatpush1.msra.mxu0 0.0
    %1927 = vmatprep.subr.mxu0 0.0
    %1928 = vmatpush1.msra.mxu0 0.0
    %1929 = vmatprep.subr.mxu0 0.0
    %1930 = vmatpush1.msra.mxu0 0.0
    %1931 = vmatprep.subr.mxu0 0.0
    %1932 = vmatpush1.msra.mxu0 0.0
    %1933 = vmatprep.subr.mxu0 0.0
    %1934 = vmatpush1.msra.mxu0 0.0
    %1935 = vmatprep.subr.mxu0 0.0
    %1936 = vmatpush1.msra.mxu0 0.0
    %1937 = vmatprep.subr.mxu0 0.0
    %1938 = vmatpush1.msra.mxu0 0.0
    %1939 = vmatprep.subr.mxu0 0.0
    %1940 = vmatpush1.msra.mxu0 0.0
    %1941 = vmatprep.subr.mxu0 0.0
    %1942 = vmatpush1.msra.mxu0 0.0
    %1943 = vmatprep.subr.mxu0 0.0
    %1944 = vmatpush1.msra.mxu0 0.0
    %1945 = vmatprep.subr.mxu0 0.0
    %1946 = vmatpush1.msra.mxu0 0.0
    %1947 = vmatprep.subr.mxu0 0.0
    %1948 = vmatpush1.msra.mxu0 0.0
    %1949 = vmatprep.subr.mxu0 0.0
    %1950 = vmatpush1.msra.mxu0 0.0
    %1951 = vmatprep.subr.mxu0 0.0
    %1952 = vmatpush1.msra.mxu0 0.0
    %1953 = vmatprep.subr.mxu0 0.0
    %1954 = vmatpush1.msra.mxu0 0.0
    %1955 = vmatprep.subr.mxu0 0.0
    %1956 = vmatpush1.msra.mxu0 0.0
    %1957 = vmatprep.subr.mxu0 0.0
    %1958 = vmatpush1.msra.mxu0 0.0
    %1959 = vmatprep.subr.mxu0 0.0
    %1960 = vmatpush1.msra.mxu0 0.0
    %1961 = vmatprep.subr.mxu0 0.0
    %1962 = vmatpush1.msra.mxu0 0.0
    %1963 = vmatprep.subr.mxu0 0.0
    %1964 = vmatpush1.msra.mxu0 0.0
    %1965 = vmatprep.subr.mxu0 0.0
    %1966 = vmatpush1.msra.mxu0 0.0
    %1967 = vmatprep.subr.mxu0 0.0
    %1968 = vmatpush1.msra.mxu0 0.0
    %1969 = vmatprep.subr.mxu0 0.0
    %1970 = vmatpush1.msra.mxu0 0.0
    %1971 = vmatprep.mubr.f32.mxu0 0.0
    %1972 = vmatmul.mubr.f32.gmra.mrb[0].mxu0 %v1905
    %v1973 = vpop.f32.mrb[0].mxu0
    %v1974 = vadd.f32 %v1900, %v1973
    %v1975 = vpop.f32.mrb[0].mxu0
    %1976 = vdwg.mxu0
    %v1977 = vld [vmem:[%s11] sm:$0x1]
    %v1979 = vlaneseq
    %v1980 = vshrl.u32 %v1979, 7
    %v1981 = vsub.s32 0, %v1980
    %v1982 = vrot.slane %v1977, %v1981
    %v1984 = vadd.f32 %v1974, %v1982
    %v1985 = vmax.f32 %v1984, 0.0
    %v1986 = vld [vmem:[%s12] sm:$0xff]
    %v1987 = vld [vmem:[%s12 + $0x8] sm:$0xff]
    %v1988 = vld [vmem:[%s12 + $0x10] sm:$0xff]
    %v1989 = vld [vmem:[%s12 + $0x18] sm:$0xff]
    %v1990 = vld [vmem:[%s12 + $0x20] sm:$0xff]
    %v1991 = vld [vmem:[%s12 + $0x28] sm:$0xff]
    %v1992 = vld [vmem:[%s12 + $0x30] sm:$0xff]
    %v1993 = vld [vmem:[%s12 + $0x38] sm:$0xff]
    %v1994 = vld [vmem:[%s13] sm:$0x1]
    %v1996 = vlaneseq
    %v1997 = vshrl.u32 %v1996, 7
    %v1998 = vsub.s32 0, %v1997
    %v1999 = vrot.slane %v1994, %v1998
    %v2002 = vsel %vm512, %v1985, 0
    %2004 = vmatprep.subr.mxu0 0.0
    %2005 = vmatpush1.msra.mxu0 %v1986
    %2006 = vmatprep.subr.mxu0 0.0
    %2007 = vmatpush1.msra.mxu0 %v1987
    %2008 = vmatprep.subr.mxu0 0.0
    %2009 = vmatpush1.msra.mxu0 %v1988
    %2010 = vmatprep.subr.mxu0 0.0
    %2011 = vmatpush1.msra.mxu0 %v1989
    %2012 = vmatprep.subr.mxu0 0.0
    %2013 = vmatpush1.msra.mxu0 %v1990
    %2014 = vmatprep.subr.mxu0 0.0
    %2015 = vmatpush1.msra.mxu0 %v1991
    %2016 = vmatprep.subr.mxu0 0.0
    %2017 = vmatpush1.msra.mxu0 %v1992
    %2018 = vmatprep.subr.mxu0 0.0
    %2019 = vmatpush1.msra.mxu0 %v1993
    %2020 = vmatprep.subr.mxu0 0.0
    %2021 = vmatpush1.msra.mxu0 0.0
    %2022 = vmatprep.subr.mxu0 0.0
    %2023 = vmatpush1.msra.mxu0 0.0
    %2024 = vmatprep.subr.mxu0 0.0
    %2025 = vmatpush1.msra.mxu0 0.0
    %2026 = vmatprep.subr.mxu0 0.0
    %2027 = vmatpush1.msra.mxu0 0.0
    %2028 = vmatprep.subr.mxu0 0.0
    %2029 = vmatpush1.msra.mxu0 0.0
    %2030 = vmatprep.subr.mxu0 0.0
    %2031 = vmatpush1.msra.mxu0 0.0
    %2032 = vmatprep.subr.mxu0 0.0
    %2033 = vmatpush1.msra.mxu0 0.0
    %2034 = vmatprep.subr.mxu0 0.0
    %2035 = vmatpush1.msra.mxu0 0.0
    %2036 = vmatprep.subr.mxu0 0.0
    %2037 = vmatpush1.msra.mxu0 0.0
    %2038 = vmatprep.subr.mxu0 0.0
    %2039 = vmatpush1.msra.mxu0 0.0
    %2040 = vmatprep.subr.mxu0 0.0
    %2041 = vmatpush1.msra.mxu0 0.0
    %2042 = vmatprep.subr.mxu0 0.0
    %2043 = vmatpush1.msra.mxu0 0.0
    %2044 = vmatprep.subr.mxu0 0.0
    %2045 = vmatpush1.msra.mxu0 0.0
    %2046 = vmatprep.subr.mxu0 0.0
    %2047 = vmatpush1.msra.mxu0 0.0
    %2048 = vmatprep.subr.mxu0 0.0
    %2049 = vmatpush1.msra.mxu0 0.0
    %2050 = vmatprep.subr.mxu0 0.0
    %2051 = vmatpush1.msra.mxu0 0.0
    %2052 = vmatprep.subr.mxu0 0.0
    %2053 = vmatpush1.msra.mxu0 0.0
    %2054 = vmatprep.subr.mxu0 0.0
    %2055 = vmatpush1.msra.mxu0 0.0
    %2056 = vmatprep.subr.mxu0 0.0
    %2057 = vmatpush1.msra.mxu0 0.0
    %2058 = vmatprep.subr.mxu0 0.0
    %2059 = vmatpush1.msra.mxu0 0.0
    %2060 = vmatprep.subr.mxu0 0.0
    %2061 = vmatpush1.msra.mxu0 0.0
    %2062 = vmatprep.subr.mxu0 0.0
    %2063 = vmatpush1.msra.mxu0 0.0
    %2064 = vmatprep.subr.mxu0 0.0
    %2065 = vmatpush1.msra.mxu0 0.0
    %2066 = vmatprep.subr.mxu0 0.0
    %2067 = vmatpush1.msra.mxu0 0.0
    %2068 = vmatprep.mubr.f32.mxu0 0.0
    %2069 = vmatmul.mubr.f32.gmra.mrb[0].mxu0 %v2002
    %v2070 = vpop.f32.mrb[0].mxu0
    %v2071 = vadd.f32 %v1999, %v2070
    %v2072 = vpop.f32.mrb[0].mxu0
    %2073 = vdwg.mxu0
    %vm2074 = vcmask 9216
    %2075 = vst.msk [vmem:[#allocation17] sm:$0x3] %vm2074, %v2071
    // Predicated region
    $region90: #{tpu_custom_call.1} parent=1 // pred_check
      _
    $region91: #{tpu_custom_call.1} parent=1 // pred_check_branch
      %2077 = sbr.rel (0) target = $region93
    $region92: #{tpu_custom_call.1} parent=1 // pred_region
      %s2079 = ssub.s32 32, 32
      %2080 = vsyncadd [#allocation5], %s2079
      %s2082 = sshll.u32 [#allocation17], 4
      %s2083 = int_to_ptr.vmem [resolvable:$true] %s2082
      %2085 = dma.vmem_to_hbm [thread:$0]  %s2083, 32, %s14, [#allocation5]
    $region93: #{tpu_custom_call.1} parent=1 // pred_fallthru
      _
    // Predicated region
    $region94: #{tpu_custom_call.1} parent=1 // pred_check
      _
    $region95: #{tpu_custom_call.1} parent=1 // pred_check_branch
      %2087 = sbr.rel (0) target = $region97
    $region96: #{tpu_custom_call.1} parent=1 // pred_region
      %2088 = dma.done [#allocation5], 32
    $region97: #{tpu_custom_call.1} parent=1 // pred_fallthru
      _
    %2089 = vsyncpa [#allocation4], 1
    %2090 = vsyncpa [#allocation7], 1
    %2091 = vsyncpa [#allocation10], 1
    %2092 = vsyncpa [#allocation13], 1
    %2093 = vsyncpa [#allocation16], 1
    %2094 = vsyncpa [#allocation5], 1

</llo_original>
